<compile_context>
chip_gen: v7x
topology: tpu7x:2x2x1
jax: 0.10.0
libtpu: 0.0.40
codegen_flags: <defaults>
</compile_context>

<pallas_src>
import jax
import jax.numpy as jnp
from jax.experimental import pallas as pl
from jax.experimental.pallas import tpu as pltpu

N_EMB = 128
N_HEAD = 16
HIDDEN = N_EMB * N_HEAD  # 2048


def ffwd_kernel(x_ref, w1_ref, b1_ref, w2_ref, b2_ref, o_ref):
    # x_ref:  (Mb, C)   VMEM f32 -- Mb rows of the flattened (B*T, C) input
    # w1_ref: (C, H)    VMEM bf16 -- resident across grid steps
    # b1_ref: (1, H)    VMEM f32
    # w2_ref: (H, C)    VMEM bf16 -- resident across grid steps
    # b2_ref: (1, C)    VMEM f32
    # o_ref:  (Mb, C)   VMEM f32
    x = x_ref[...].astype(jnp.bfloat16)

    # First matmul: bf16 operands, f32 accumulation on the MXU.
    h = jnp.dot(x, w1_ref[...], preferred_element_type=jnp.float32)
    h = h + b1_ref[...]                       # broadcast (1, H) over rows, f32
    h = jnp.maximum(h, 0.0)                   # ReLU, f32

    # Second matmul: cast hidden to bf16 at the dot, keep f32 accumulate.
    out = jnp.dot(h.astype(jnp.bfloat16), w2_ref[...],
                  preferred_element_type=jnp.float32)
    out = out + b2_ref[...]                   # broadcast (1, C) over rows

    # Dropout(p=0.1) -> identity (see TODO above).
    o_ref[...] = out.astype(o_ref.dtype)


def feedforward_forward(x, w1, b1, w2, b2, *, block_m=512):
    """x: (B, T, C); w1: (C, H); b1: (H,); w2: (H, C); b2: (C,)."""
    B, T, C = x.shape
    H = w1.shape[1]
    M = B * T
    xf = x.reshape(M, C)

    # Weights stored / DMA'd as bf16 (halves weight HBM traffic + VMEM).
    w1b = w1.astype(jnp.bfloat16)
    w2b = w2.astype(jnp.bfloat16)
    b1f = b1.reshape(1, H).astype(jnp.float32)
    b2f = b2.reshape(1, C).astype(jnp.float32)

    # Row block: big enough to amortize per-step overhead, multiple of 8
    # (sublane), but never so big that the grid collapses to a single step --
    # keep >= 2 steps so v7x's two TensorCores both get work.
    half = -(-M // 2)                     # cdiv(M, 2)
    half8 = ((half + 7) // 8) * 8         # round up to sublane multiple
    mb = max(8, min(block_m, half8))
    grid_m = pl.cdiv(M, mb)               # ragged last block handled by Pallas

    mc = grid_m * mb                       # rows actually computed (incl. pad)
    flops = 4 * mc * C * H                 # two matmuls, 2 flops/MAC
    bytes_accessed = (4 * 2 * M * C        # x in + out, f32
                      + 2 * 2 * C * H      # W1 + W2, bf16
                      + 4 * (H + C))       # biases, f32

    out = pl.pallas_call(
        ffwd_kernel,
        out_shape=jax.ShapeDtypeStruct((M, C), x.dtype),
        grid_spec=pltpu.PrefetchScalarGridSpec(
            num_scalar_prefetch=0,
            grid=(grid_m,),
            in_specs=[
                pl.BlockSpec((mb, C), lambda i: (i, 0)),   # x rows
                pl.BlockSpec((C, H), lambda i: (0, 0)),     # W1 (resident)
                pl.BlockSpec((1, H), lambda i: (0, 0)),     # b1
                pl.BlockSpec((H, C), lambda i: (0, 0)),     # W2 (resident)
                pl.BlockSpec((1, C), lambda i: (0, 0)),     # b2
            ],
            out_specs=pl.BlockSpec((mb, C), lambda i: (i, 0)),
        ),
        compiler_params=pltpu.CompilerParams(
            dimension_semantics=("parallel",)),
        cost_estimate=pl.CostEstimate(
            flops=flops, transcendentals=0, bytes_accessed=bytes_accessed),
    )(xf, w1b, b1f, w2b, b2f)

    return out.reshape(B, T, C)


def reference_forward(x, w1, b1, w2, b2):
    # Pure-JAX f32 reference mirroring the PyTorch forward (eval-mode dropout).
    h = jnp.dot(x, w1, precision=jax.lax.Precision.HIGHEST) + b1
    h = jnp.maximum(h, 0.0)
    return jnp.dot(h, w2, precision=jax.lax.Precision.HIGHEST) + b2


if __name__ == "__main__":
    key = jax.random.PRNGKey(0)
    kx, kw1, kb1, kw2, kb2 = jax.random.split(key, 5)

    B, T, C, H = 2, 16, N_EMB, HIDDEN

    x = jax.random.normal(kx, (B, T, C), dtype=jnp.float32)

    # PyTorch nn.Linear-style init bounds, weights stored as (in, out).
    bound1 = 1.0 / jnp.sqrt(jnp.float32(C))
    w1 = jax.random.uniform(kw1, (C, H), jnp.float32, -bound1, bound1)
    b1 = jax.random.uniform(kb1, (H,), jnp.float32, -bound1, bound1)
    bound2 = 1.0 / jnp.sqrt(jnp.float32(H))
    w2 = jax.random.uniform(kw2, (H, C), jnp.float32, -bound2, bound2)
    b2 = jax.random.uniform(kb2, (C,), jnp.float32, -bound2, bound2)

    out = feedforward_forward(x, w1, b1, w2, b2)
    out = jax.block_until_ready(out)

    ref = reference_forward(x, w1, b1, w2, b2)
    assert out.shape == (B, T, C), out.shape
    # bf16 MXU operands (f32 accumulation) vs. f32 HIGHEST reference:
    # tolerance relaxed accordingly.
    assert jnp.allclose(out, ref, atol=3e-2, rtol=3e-2), \
        float(jnp.max(jnp.abs(out - ref)))

    print("KERNEL_OK")
</pallas_src>

<mosaic_0001>
module attributes {stable_mosaic.version = 11 : i64} {
  func.func @ffwd_kernel(%arg0: i32, %arg1: memref<16x128xf32, #tpu.memory_space<vmem>>, %arg2: memref<128x2048xbf16, #tpu.memory_space<vmem>>, %arg3: memref<1x2048xf32, #tpu.memory_space<vmem>>, %arg4: memref<2048x128xbf16, #tpu.memory_space<vmem>>, %arg5: memref<1x128xf32, #tpu.memory_space<vmem>>, %arg6: memref<16x128xf32, #tpu.memory_space<vmem>>) attributes {dimension_semantics = [#tpu.dimension_semantics<parallel>], iteration_bounds = array<i64: 2>, scalar_prefetch = 0 : i64, scratch_operands = 0 : i64, tpu.core_type = #tpu.core_type<tc>, window_params = [{transform_indices = @transform_0, window_bounds = array<i64: 16, 128>}, {pipeline_mode = #tpu.pipeline_mode<synchronous>, transform_indices = @transform_1, window_bounds = array<i64: 128, 2048>}, {pipeline_mode = #tpu.pipeline_mode<synchronous>, transform_indices = @transform_2, window_bounds = array<i64: 1, 2048>}, {pipeline_mode = #tpu.pipeline_mode<synchronous>, transform_indices = @transform_3, window_bounds = array<i64: 2048, 128>}, {pipeline_mode = #tpu.pipeline_mode<synchronous>, transform_indices = @transform_4, window_bounds = array<i64: 1, 128>}, {transform_indices = @transform_5, window_bounds = array<i64: 16, 128>}]} {
    %c0 = arith.constant 0 : index
    %c0_0 = arith.constant 0 : index
    %0 = vector.load %arg1[%c0, %c0_0] : memref<16x128xf32, #tpu.memory_space<vmem>>, vector<16x128xf32>
    %1 = arith.truncf %0 : vector<16x128xf32> to vector<16x128xbf16>
    %c0_1 = arith.constant 0 : index
    %c0_2 = arith.constant 0 : index
    %2 = vector.load %arg2[%c0_1, %c0_2] : memref<128x2048xbf16, #tpu.memory_space<vmem>>, vector<128x2048xbf16>
    %cst = arith.constant dense<0.000000e+00> : vector<16x2048xf32>
    %3 = tpu.matmul %1, %2, %cst {dimension_numbers = #tpu.dot_dimension_numbers<[1], [0], [0], [1], [0, 0, 1, 1], [], []>} : vector<16x128xbf16>, vector<128x2048xbf16>, vector<16x2048xf32> -> vector<16x2048xf32>
    %c0_3 = arith.constant 0 : index
    %c0_4 = arith.constant 0 : index
    %4 = vector.load %arg3[%c0_3, %c0_4] : memref<1x2048xf32, #tpu.memory_space<vmem>>, vector<1x2048xf32>
    %5 = vector.broadcast %4 : vector<1x2048xf32> to vector<16x2048xf32>
    %6 = arith.addf %3, %5 : vector<16x2048xf32>
    %cst_5 = arith.constant 0.000000e+00 : f32
    %7 = vector.broadcast %cst_5 : f32 to vector<16x2048xf32>
    %8 = arith.maximumf %6, %7 : vector<16x2048xf32>
    %9 = arith.truncf %8 : vector<16x2048xf32> to vector<16x2048xbf16>
    %c0_6 = arith.constant 0 : index
    %c0_7 = arith.constant 0 : index
    %10 = vector.load %arg4[%c0_6, %c0_7] : memref<2048x128xbf16, #tpu.memory_space<vmem>>, vector<2048x128xbf16>
    %cst_8 = arith.constant dense<0.000000e+00> : vector<16x128xf32>
    %11 = tpu.matmul %9, %10, %cst_8 {dimension_numbers = #tpu.dot_dimension_numbers<[1], [0], [0], [1], [0, 0, 1, 1], [], []>} : vector<16x2048xbf16>, vector<2048x128xbf16>, vector<16x128xf32> -> vector<16x128xf32>
    %c0_9 = arith.constant 0 : index
    %c0_10 = arith.constant 0 : index
    %12 = vector.load %arg5[%c0_9, %c0_10] : memref<1x128xf32, #tpu.memory_space<vmem>>, vector<1x128xf32>
    %13 = vector.broadcast %12 : vector<1x128xf32> to vector<16x128xf32>
    %14 = arith.addf %11, %13 : vector<16x128xf32>
    %c0_11 = arith.constant 0 : index
    %c0_12 = arith.constant 0 : index
    %15 = vector.load %arg6[%c0_11, %c0_12] : memref<16x128xf32, #tpu.memory_space<vmem>>, vector<16x128xf32>
    tpu.vector_store %arg6[%c0_11, %c0_12], %14 {strides = array<i32>} : memref<16x128xf32, #tpu.memory_space<vmem>>, vector<16x128xf32>,
    return
  }
  func.func @transform_0(%arg0: i32) -> (i32, i32) {
    %c0_i32 = arith.constant 0 : i32
    %c0_i32_0 = arith.constant 0 : i32
    return %arg0, %c0_i32 : i32, i32
  }
  func.func @transform_1(%arg0: i32) -> (i32, i32) {
    %c0_i32 = arith.constant 0 : i32
    %c0_i32_0 = arith.constant 0 : i32
    %c0_i32_1 = arith.constant 0 : i32
    return %c0_i32, %c0_i32_0 : i32, i32
  }
  func.func @transform_2(%arg0: i32) -> (i32, i32) {
    %c0_i32 = arith.constant 0 : i32
    %c0_i32_0 = arith.constant 0 : i32
    %c0_i32_1 = arith.constant 0 : i32
    return %c0_i32, %c0_i32_0 : i32, i32
  }
  func.func @transform_3(%arg0: i32) -> (i32, i32) {
    %c0_i32 = arith.constant 0 : i32
    %c0_i32_0 = arith.constant 0 : i32
    %c0_i32_1 = arith.constant 0 : i32
    return %c0_i32, %c0_i32_0 : i32, i32
  }
  func.func @transform_4(%arg0: i32) -> (i32, i32) {
    %c0_i32 = arith.constant 0 : i32
    %c0_i32_0 = arith.constant 0 : i32
    %c0_i32_1 = arith.constant 0 : i32
    return %c0_i32, %c0_i32_0 : i32, i32
  }
  func.func @transform_5(%arg0: i32) -> (i32, i32) {
    %c0_i32 = arith.constant 0 : i32
    %c0_i32_0 = arith.constant 0 : i32
    return %arg0, %c0_i32 : i32, i32
  }
}

</mosaic_0001>

<llo_original>
// kernel: tpu_custom_call.1
$region0: #{tpu_custom_call.1}
  #allocation0 [shape = 'u32[]', space=smem, size = 0x4, offset = 0x4, fixed_abs, tag = 'smem constant byte address 0x4 - core index']
  #allocation1 [shape = 'u32[144,128]{1,0:T(1,128)}', space=vmem, size = 0x12000, scoped, tag = 'internal scratch']
  %s0 = inlined_call_operand.hbm [shape: f32[32,128], index: 0, kind: input, shape index: {}]
  %s1 = inlined_call_operand.hbm [shape: bf16[128,2048], index: 1, kind: input, shape index: {}]
  %s2 = inlined_call_operand.hbm [shape: f32[1,2048], index: 2, kind: input, shape index: {}]
  %s3 = inlined_call_operand.hbm [shape: bf16[2048,128], index: 3, kind: input, shape index: {}]
  %s4 = inlined_call_operand.vmem [shape: f32[1,128], index: 4, kind: input, shape index: {}]
  %s5 = inlined_call_operand.hbm [shape: f32[32,128], index: 5, kind: output, shape index: {}]
  %s6 = sld [smem:[#allocation0]]
  $region69: #{tpu_custom_call.1} parent=0
    _
  %s8 = ssub.s32 1, %s6
  %s9 = scalar_select 0, %s8, %s6
  $region1: #{tpu_custom_call.1} parent=0
    #allocation2 [shape = 'u8[16384]{0}', space=vmem, size = 0x4000, scoped, tag = 'input window, operand 0']
    #allocation3 [shape = 's32[2]{0}', space=sflag, size = 0x8, scoped, tag = 'scoped memory for tpu_custom_call.1']
    #allocation4 [shape = 's32[2]{0}', space=sflag, size = 0x8, scoped, tag = 'scoped memory for tpu_custom_call.1']
    #allocation5 [shape = 'u8[524288]{0}', space=vmem, size = 0x80000, scoped, tag = 'input window, operand 1, single buffered']
    #allocation6 [shape = 's32[1]{0}', space=sflag, size = 0x4, scoped, tag = 'scoped memory for tpu_custom_call.1']
    #allocation7 [shape = 'u8[8192]{0}', space=vmem, size = 0x2000, scoped, tag = 'input window, operand 2, single buffered']
    #allocation8 [shape = 'u8[524288]{0}', space=vmem, size = 0x80000, scoped, tag = 'input window, operand 3, single buffered']
    #allocation9 [shape = 's32[1]{0}', space=sflag, size = 0x4, scoped, tag = 'scoped memory for tpu_custom_call.1']
    #allocation10 [shape = 'u8[16384]{0}', space=vmem, size = 0x4000, scoped, tag = 'output window, operand 0']
    %10 = vsyncpa [#allocation3], 0
    %s11 = scalar_lea.sflag [#allocation3], 1
    %12 = vsyncpa %s11, 0
    %13 = vsyncpa [#allocation6], 0
    %14 = vsyncpa [#allocation9], 0
    %15 = vsyncpa [#allocation4], 0
    %s16 = scalar_lea.sflag [#allocation4], 1
    %17 = vsyncpa %s16, 0
    loop: start=0, step=1, limit=4
    $region2: #{tpu_custom_call.1} parent=1 // loop_pre_header
      _
    $region3: #{tpu_custom_call.1} parent=1 // loop_header
      %s19 = sphi 0, %s23
      %p20 = scmp.ge.s32.totalorder %s19, 4
      %s29 = sphi 0, %s31
      %s32 = sphi 0, %s29
      %s33 = sphi 0, %s32
      %s49 = sphi 0, %s33
      %s53 = sphi 0, %s53
      %s55 = sphi 0, %s53
      %s56 = sphi 0, %s55
      %s70 = sphi 0, %s56
      %s74 = sphi 0, %s74
      %s76 = sphi 0, %s74
      %s77 = sphi 0, %s76
      %s91 = sphi 0, %s77
      %s95 = sphi 0, %s95
      %s97 = sphi 0, %s95
      %s98 = sphi 0, %s97
      %s112 = sphi 0, %s98
      %s116 = sphi 0, %s116
      %s118 = sphi 0, %s116
      %s119 = sphi 0, %s118
      %s133 = sphi 0, %s119
      %s139 = sphi 0, %s141
      %s142 = sphi 0, %s139
      %s143 = sphi 0, %s142
      %s159 = sphi 0, %s143
    $region4: #{tpu_custom_call.1} parent=1 // loop_header_branch
      %22 = sbr.rel (%p20) target = $region8
    $region5: #{tpu_custom_call.1} parent=1 // loop_body
      %s24 = ssub.s32 %s19, 1
      %s25 = ssub.s32 %s19, 2
      %s26 = sadd.s32 %s19, 1
      %s27 = ssub.s32 %s19, %s26
      %p28 = scmp.eq.s32.totalorder %s27, 0
      %s30 = sadd.s32 %s29, 1
      %s31 = scalar_select %p28, %s29, %s30
      %p34 = pneg %p28
      %p35 = scmp.eq.s32.totalorder %s19, 1
      %p36 = por %p34, %p35
      %p37 = scmp.ne.s32.totalorder %s29, %s32
      %p38 = scmp.eq.s32.totalorder %s19, 0
      %p39 = por %p37, %p38
      %p40 = scmp.ne.s32.totalorder %s29, %s32
      %p41 = scmp.eq.s32.totalorder %s24, 1
      %p42 = por %p40, %p41
      %p43 = scmp.ne.s32.totalorder %s32, %s33
      %p44 = scmp.eq.s32.totalorder %s24, 0
      %p45 = por %p43, %p44
      %p46 = scmp.ne.s32.totalorder %s32, %s33
      %p47 = scmp.eq.s32.totalorder %s25, 1
      %p48 = por %p46, %p47
      %p50 = scmp.ne.s32.totalorder %s33, %s49
      %p51 = scmp.eq.s32.totalorder %s25, 0
      %p52 = por %p50, %p51
      %s54 = sadd.s32 %s53, 1
      %p57 = scmp.eq.s32.totalorder %s19, 1
      %p58 = scmp.ne.s32.totalorder %s53, %s55
      %p59 = scmp.eq.s32.totalorder %s19, 0
      %p60 = por %p58, %p59
      %p61 = scmp.ne.s32.totalorder %s53, %s55
      %p62 = scmp.eq.s32.totalorder %s24, 1
      %p63 = por %p61, %p62
      %p64 = scmp.ne.s32.totalorder %s55, %s56
      %p65 = scmp.eq.s32.totalorder %s24, 0
      %p66 = por %p64, %p65
      %p67 = scmp.ne.s32.totalorder %s55, %s56
      %p68 = scmp.eq.s32.totalorder %s25, 1
      %p69 = por %p67, %p68
      %p71 = scmp.ne.s32.totalorder %s56, %s70
      %p72 = scmp.eq.s32.totalorder %s25, 0
      %p73 = por %p71, %p72
      %s75 = sadd.s32 %s74, 1
      %p78 = scmp.eq.s32.totalorder %s19, 1
      %p79 = scmp.ne.s32.totalorder %s74, %s76
      %p80 = scmp.eq.s32.totalorder %s19, 0
      %p81 = por %p79, %p80
      %p82 = scmp.ne.s32.totalorder %s74, %s76
      %p83 = scmp.eq.s32.totalorder %s24, 1
      %p84 = por %p82, %p83
      %p85 = scmp.ne.s32.totalorder %s76, %s77
      %p86 = scmp.eq.s32.totalorder %s24, 0
      %p87 = por %p85, %p86
      %p88 = scmp.ne.s32.totalorder %s76, %s77
      %p89 = scmp.eq.s32.totalorder %s25, 1
      %p90 = por %p88, %p89
      %p92 = scmp.ne.s32.totalorder %s77, %s91
      %p93 = scmp.eq.s32.totalorder %s25, 0
      %p94 = por %p92, %p93
      %s96 = sadd.s32 %s95, 1
      %p99 = scmp.eq.s32.totalorder %s19, 1
      %p100 = scmp.ne.s32.totalorder %s95, %s97
      %p101 = scmp.eq.s32.totalorder %s19, 0
      %p102 = por %p100, %p101
      %p103 = scmp.ne.s32.totalorder %s95, %s97
      %p104 = scmp.eq.s32.totalorder %s24, 1
      %p105 = por %p103, %p104
      %p106 = scmp.ne.s32.totalorder %s97, %s98
      %p107 = scmp.eq.s32.totalorder %s24, 0
      %p108 = por %p106, %p107
      %p109 = scmp.ne.s32.totalorder %s97, %s98
      %p110 = scmp.eq.s32.totalorder %s25, 1
      %p111 = por %p109, %p110
      %p113 = scmp.ne.s32.totalorder %s98, %s112
      %p114 = scmp.eq.s32.totalorder %s25, 0
      %p115 = por %p113, %p114
      %s117 = sadd.s32 %s116, 1
      %p120 = scmp.eq.s32.totalorder %s19, 1
      %p121 = scmp.ne.s32.totalorder %s116, %s118
      %p122 = scmp.eq.s32.totalorder %s19, 0
      %p123 = por %p121, %p122
      %p124 = scmp.ne.s32.totalorder %s116, %s118
      %p125 = scmp.eq.s32.totalorder %s24, 1
      %p126 = por %p124, %p125
      %p127 = scmp.ne.s32.totalorder %s118, %s119
      %p128 = scmp.eq.s32.totalorder %s24, 0
      %p129 = por %p127, %p128
      %p130 = scmp.ne.s32.totalorder %s118, %s119
      %p131 = scmp.eq.s32.totalorder %s25, 1
      %p132 = por %p130, %p131
      %p134 = scmp.ne.s32.totalorder %s119, %s133
      %p135 = scmp.eq.s32.totalorder %s25, 0
      %p136 = por %p134, %p135
      %s137 = ssub.s32 %s19, %s26
      %p138 = scmp.eq.s32.totalorder %s137, 0
      %s140 = sadd.s32 %s139, 1
      %s141 = scalar_select %p138, %s139, %s140
      %p144 = pneg %p138
      %p145 = scmp.eq.s32.totalorder %s19, 1
      %p146 = por %p144, %p145
      %p147 = scmp.ne.s32.totalorder %s139, %s142
      %p148 = scmp.eq.s32.totalorder %s19, 0
      %p149 = por %p147, %p148
      %p150 = scmp.ne.s32.totalorder %s139, %s142
      %p151 = scmp.eq.s32.totalorder %s24, 1
      %p152 = por %p150, %p151
      %p153 = scmp.ne.s32.totalorder %s142, %s143
      %p154 = scmp.eq.s32.totalorder %s24, 0
      %p155 = por %p153, %p154
      %p156 = scmp.ne.s32.totalorder %s142, %s143
      %p157 = scmp.eq.s32.totalorder %s25, 1
      %p158 = por %p156, %p157
      %p160 = scmp.ne.s32.totalorder %s143, %s159
      %p161 = scmp.eq.s32.totalorder %s25, 0
      %p162 = por %p160, %p161
      %p163 = scmp.le.s32.totalorder 1, %s19
      %p164 = scmp.lt.s32.totalorder %s19, 3
      %p165 = pnand %p163, %p164
      %p166 = pneg %p165
      // Predicated region
      $region9: #{tpu_custom_call.1} parent=5 // pred_check
        _
      $region10: #{tpu_custom_call.1} parent=5 // pred_check_branch
        %168 = sbr.rel (%p165) target = $region12
      $region11: #{tpu_custom_call.1} parent=5 // pred_region
        %s169 = ssub.s32 %s19, 1
        // Predicated region
        $region13: #{tpu_custom_call.1} parent=11 // pred_check
          %p170 = pneg %p66
        $region14: #{tpu_custom_call.1} parent=11 // pred_check_branch
          %172 = sbr.rel (%p170) target = $region16
        $region15: #{tpu_custom_call.1} parent=11 // pred_region
          %s174 = ssub.s32 16384, 16384
          %175 = vsyncadd [#allocation6], %s174
          %s176 = sshll.u32 [#allocation5], 4
          %s177 = int_to_ptr.vmem [resolvable:$true] %s176
          %182 = dma.hbm_to_vmem [thread:$0]  %s1, 16384, %s177, [#allocation6], 1024, 1024, 64
        $region16: #{tpu_custom_call.1} parent=11 // pred_fallthru
          _
        // Predicated region
        $region17: #{tpu_custom_call.1} parent=11 // pred_check
          %p183 = pneg %p87
        $region18: #{tpu_custom_call.1} parent=11 // pred_check_branch
          %185 = sbr.rel (%p183) target = $region20
        $region19: #{tpu_custom_call.1} parent=11 // pred_region
          %s187 = ssub.s32 256, 256
          %188 = vsyncadd [#allocation6], %s187
          %s190 = sshll.u32 [#allocation7], 4
          %s191 = int_to_ptr.vmem [resolvable:$true] %s190
          %193 = dma.hbm_to_vmem [thread:$0]  %s2, 256, %s191, [#allocation6]
        $region20: #{tpu_custom_call.1} parent=11 // pred_fallthru
          _
        // Predicated region
        $region21: #{tpu_custom_call.1} parent=11 // pred_check
          %p194 = pneg %p108
        $region22: #{tpu_custom_call.1} parent=11 // pred_check_branch
          %196 = sbr.rel (%p194) target = $region24
        $region23: #{tpu_custom_call.1} parent=11 // pred_region
          %s198 = ssub.s32 16384, 16384
          %199 = vsyncadd [#allocation9], %s198
          %s200 = sshll.u32 [#allocation8], 4
          %s201 = int_to_ptr.vmem [resolvable:$true] %s200
          %206 = dma.hbm_to_vmem [thread:$0]  %s3, 16384, %s201, [#allocation9], 64, 64, 4
        $region24: #{tpu_custom_call.1} parent=11 // pred_fallthru
          _
        // Predicated region
        $region25: #{tpu_custom_call.1} parent=11 // pred_check
          %p207 = pneg %p129
        $region26: #{tpu_custom_call.1} parent=11 // pred_check_branch
          %209 = sbr.rel (%p207) target = $region28
        $region27: #{tpu_custom_call.1} parent=11 // pred_region
          _
        $region28: #{tpu_custom_call.1} parent=11 // pred_fallthru
          _
      $region12: #{tpu_custom_call.1} parent=5 // pred_fallthru
        _
      %p210 = scmp.lt.s32.totalorder %s19, 2
      // Predicated region
      $region29: #{tpu_custom_call.1} parent=5 // pred_check
        %p211 = pneg %p210
      $region30: #{tpu_custom_call.1} parent=5 // pred_check_branch
        %213 = sbr.rel (%p211) target = $region32
      $region31: #{tpu_custom_call.1} parent=5 // pred_region
        // Predicated region
        $region33: #{tpu_custom_call.1} parent=31 // pred_check
          %p214 = pneg %p39
        $region34: #{tpu_custom_call.1} parent=31 // pred_check_branch
          %216 = sbr.rel (%p214) target = $region36
        $region35: #{tpu_custom_call.1} parent=31 // pred_region
          %s217 = sand.u32 %s29, 1
          %s218 = scalar_lea.sflag [#allocation3], %s217
          %s219 = sand.u32 %s29, 1
          %s220 = smul.addr %s219, 16
          %s221 = scalar_lea.vmem [#allocation2], %s220
          %s222 = smul.u32 2, %s19
          %s224 = ssub.s32 256, 256
          %225 = vsyncadd %s218, %s224
          %s226 = smul.addr %s222, 128
          %s227 = scalar_lea.hbm %s0, %s226
          %s228 = sshll.u32 %s221, 4
          %s229 = int_to_ptr.vmem [resolvable:$true] %s228
          %234 = dma.hbm_to_vmem [thread:$0]  %s227, 256, %s229, %s218, 128, 128, 8
        $region36: #{tpu_custom_call.1} parent=31 // pred_fallthru
          _
      $region32: #{tpu_custom_call.1} parent=5 // pred_fallthru
        _
      %p235 = scmp.le.s32.totalorder 1, %s19
      %p236 = scmp.lt.s32.totalorder %s19, 3
      %p237 = pnand %p235, %p236
      %p238 = pneg %p237
      // Predicated region
      $region37: #{tpu_custom_call.1} parent=5 // pred_check
        _
      $region38: #{tpu_custom_call.1} parent=5 // pred_check_branch
        %240 = sbr.rel (%p237) target = $region40
      $region39: #{tpu_custom_call.1} parent=5 // pred_region
        %s241 = ssub.s32 %s19, 1
        %s242 = sand.u32 %s32, 1
        %s243 = scalar_lea.sflag [#allocation3], %s242
        %s244 = sand.u32 %s32, 1
        %s245 = smul.addr %s244, 16
        %s246 = scalar_lea.vmem [#allocation2], %s245
        // Predicated region
        $region41: #{tpu_custom_call.1} parent=39 // pred_check
          %p247 = pneg %p45
        $region42: #{tpu_custom_call.1} parent=39 // pred_check_branch
          %249 = sbr.rel (%p247) target = $region44
        $region43: #{tpu_custom_call.1} parent=39 // pred_region
          %250 = dma.done %s243, 256
        $region44: #{tpu_custom_call.1} parent=39 // pred_fallthru
          _
        // Predicated region
        $region45: #{tpu_custom_call.1} parent=39 // pred_check
          %p251 = pneg %p66
        $region46: #{tpu_custom_call.1} parent=39 // pred_check_branch
          %253 = sbr.rel (%p251) target = $region48
        $region47: #{tpu_custom_call.1} parent=39 // pred_region
          %254 = dma.done [#allocation6], 16384
        $region48: #{tpu_custom_call.1} parent=39 // pred_fallthru
          _
        // Predicated region
        $region49: #{tpu_custom_call.1} parent=39 // pred_check
          %p255 = pneg %p87
        $region50: #{tpu_custom_call.1} parent=39 // pred_check_branch
          %257 = sbr.rel (%p255) target = $region52
        $region51: #{tpu_custom_call.1} parent=39 // pred_region
          %258 = dma.done [#allocation6], 256
        $region52: #{tpu_custom_call.1} parent=39 // pred_fallthru
          _
        // Predicated region
        $region53: #{tpu_custom_call.1} parent=39 // pred_check
          %p259 = pneg %p108
        $region54: #{tpu_custom_call.1} parent=39 // pred_check_branch
          %261 = sbr.rel (%p259) target = $region56
        $region55: #{tpu_custom_call.1} parent=39 // pred_region
          %262 = dma.done [#allocation9], 16384
        $region56: #{tpu_custom_call.1} parent=39 // pred_fallthru
          _
        %s263 = sand.u32 %s32, 1
        %s264 = scalar_lea.sflag [#allocation3], %s263
        %s265 = sand.u32 %s32, 1
        %s266 = smul.addr %s265, 16
        %s267 = scalar_lea.vmem [#allocation2], %s266
        %p268 = pneg %p45
        %p269 = pneg %p42
        %p270 = pneg %p66
        %p271 = pneg %p63
        %p272 = pneg %p87
        %p273 = pneg %p84
        %p274 = pneg %p108
        %p275 = pneg %p105
        %p276 = pneg %p129
        %p277 = pneg %p126
        %p278 = pneg %p155
        %p279 = pneg %p152
        %s280 = sand.u32 %s142, 1
        %s281 = scalar_lea.sflag [#allocation4], %s280
        %s282 = sand.u32 %s142, 1
        %s283 = smul.addr %s282, 16
        %s284 = scalar_lea.vmem [#allocation10], %s283
        %s285 = smul.u32 2, %s24
        %s286 = smul.u32 2, %s24
        %v288 = vld [vmem:[%s246] sm:$0xff]
        %v289 = vld [vmem:[%s246 + $0x8] sm:$0xff]
        %v290 = vpack.c.bf16 %v289, %v288
        %v291 = vld [vmem:[#allocation5] sm:$0xff]
        %v292 = vld [vmem:[#allocation5 + $0x8] sm:$0xff]
        %v293 = vld [vmem:[#allocation5 + $0x10] sm:$0xff]
        %v294 = vld [vmem:[#allocation5 + $0x18] sm:$0xff]
        %v295 = vld [vmem:[#allocation5 + $0x20] sm:$0xff]
        %v296 = vld [vmem:[#allocation5 + $0x28] sm:$0xff]
        %v297 = vld [vmem:[#allocation5 + $0x30] sm:$0xff]
        %v298 = vld [vmem:[#allocation5 + $0x38] sm:$0xff]
        %v299 = vld [vmem:[#allocation5 + $0x40] sm:$0xff]
        %v300 = vld [vmem:[#allocation5 + $0x48] sm:$0xff]
        %v301 = vld [vmem:[#allocation5 + $0x50] sm:$0xff]
        %v302 = vld [vmem:[#allocation5 + $0x58] sm:$0xff]
        %v303 = vld [vmem:[#allocation5 + $0x60] sm:$0xff]
        %v304 = vld [vmem:[#allocation5 + $0x68] sm:$0xff]
        %v305 = vld [vmem:[#allocation5 + $0x70] sm:$0xff]
        %v306 = vld [vmem:[#allocation5 + $0x78] sm:$0xff]
        %v307 = vld [vmem:[#allocation5 + $0x80] sm:$0xff]
        %v308 = vld [vmem:[#allocation5 + $0x88] sm:$0xff]
        %v309 = vld [vmem:[#allocation5 + $0x90] sm:$0xff]
        %v310 = vld [vmem:[#allocation5 + $0x98] sm:$0xff]
        %v311 = vld [vmem:[#allocation5 + $0xa0] sm:$0xff]
        %v312 = vld [vmem:[#allocation5 + $0xa8] sm:$0xff]
        %v313 = vld [vmem:[#allocation5 + $0xb0] sm:$0xff]
        %v314 = vld [vmem:[#allocation5 + $0xb8] sm:$0xff]
        %v315 = vld [vmem:[#allocation5 + $0xc0] sm:$0xff]
        %v316 = vld [vmem:[#allocation5 + $0xc8] sm:$0xff]
        %v317 = vld [vmem:[#allocation5 + $0xd0] sm:$0xff]
        %v318 = vld [vmem:[#allocation5 + $0xd8] sm:$0xff]
        %v319 = vld [vmem:[#allocation5 + $0xe0] sm:$0xff]
        %v320 = vld [vmem:[#allocation5 + $0xe8] sm:$0xff]
        %v321 = vld [vmem:[#allocation5 + $0xf0] sm:$0xff]
        %v322 = vld [vmem:[#allocation5 + $0xf8] sm:$0xff]
        %v323 = vld [vmem:[#allocation5 + $0x100] sm:$0xff]
        %v324 = vld [vmem:[#allocation5 + $0x108] sm:$0xff]
        %v325 = vld [vmem:[#allocation5 + $0x110] sm:$0xff]
        %v326 = vld [vmem:[#allocation5 + $0x118] sm:$0xff]
        %v327 = vld [vmem:[#allocation5 + $0x120] sm:$0xff]
        %v328 = vld [vmem:[#allocation5 + $0x128] sm:$0xff]
        %v329 = vld [vmem:[#allocation5 + $0x130] sm:$0xff]
        %v330 = vld [vmem:[#allocation5 + $0x138] sm:$0xff]
        %v331 = vld [vmem:[#allocation5 + $0x140] sm:$0xff]
        %v332 = vld [vmem:[#allocation5 + $0x148] sm:$0xff]
        %v333 = vld [vmem:[#allocation5 + $0x150] sm:$0xff]
        %v334 = vld [vmem:[#allocation5 + $0x158] sm:$0xff]
        %v335 = vld [vmem:[#allocation5 + $0x160] sm:$0xff]
        %v336 = vld [vmem:[#allocation5 + $0x168] sm:$0xff]
        %v337 = vld [vmem:[#allocation5 + $0x170] sm:$0xff]
        %v338 = vld [vmem:[#allocation5 + $0x178] sm:$0xff]
        %v339 = vld [vmem:[#allocation5 + $0x180] sm:$0xff]
        %v340 = vld [vmem:[#allocation5 + $0x188] sm:$0xff]
        %v341 = vld [vmem:[#allocation5 + $0x190] sm:$0xff]
        %v342 = vld [vmem:[#allocation5 + $0x198] sm:$0xff]
        %v343 = vld [vmem:[#allocation5 + $0x1a0] sm:$0xff]
        %v344 = vld [vmem:[#allocation5 + $0x1a8] sm:$0xff]
        %v345 = vld [vmem:[#allocation5 + $0x1b0] sm:$0xff]
        %v346 = vld [vmem:[#allocation5 + $0x1b8] sm:$0xff]
        %v347 = vld [vmem:[#allocation5 + $0x1c0] sm:$0xff]
        %v348 = vld [vmem:[#allocation5 + $0x1c8] sm:$0xff]
        %v349 = vld [vmem:[#allocation5 + $0x1d0] sm:$0xff]
        %v350 = vld [vmem:[#allocation5 + $0x1d8] sm:$0xff]
        %v351 = vld [vmem:[#allocation5 + $0x1e0] sm:$0xff]
        %v352 = vld [vmem:[#allocation5 + $0x1e8] sm:$0xff]
        %v353 = vld [vmem:[#allocation5 + $0x1f0] sm:$0xff]
        %v354 = vld [vmem:[#allocation5 + $0x1f8] sm:$0xff]
        %v355 = vld [vmem:[#allocation5 + $0x200] sm:$0xff]
        %v356 = vld [vmem:[#allocation5 + $0x208] sm:$0xff]
        %v357 = vld [vmem:[#allocation5 + $0x210] sm:$0xff]
        %v358 = vld [vmem:[#allocation5 + $0x218] sm:$0xff]
        %v359 = vld [vmem:[#allocation5 + $0x220] sm:$0xff]
        %v360 = vld [vmem:[#allocation5 + $0x228] sm:$0xff]
        %v361 = vld [vmem:[#allocation5 + $0x230] sm:$0xff]
        %v362 = vld [vmem:[#allocation5 + $0x238] sm:$0xff]
        %v363 = vld [vmem:[#allocation5 + $0x240] sm:$0xff]
        %v364 = vld [vmem:[#allocation5 + $0x248] sm:$0xff]
        %v365 = vld [vmem:[#allocation5 + $0x250] sm:$0xff]
        %v366 = vld [vmem:[#allocation5 + $0x258] sm:$0xff]
        %v367 = vld [vmem:[#allocation5 + $0x260] sm:$0xff]
        %v368 = vld [vmem:[#allocation5 + $0x268] sm:$0xff]
        %v369 = vld [vmem:[#allocation5 + $0x270] sm:$0xff]
        %v370 = vld [vmem:[#allocation5 + $0x278] sm:$0xff]
        %v371 = vld [vmem:[#allocation5 + $0x280] sm:$0xff]
        %v372 = vld [vmem:[#allocation5 + $0x288] sm:$0xff]
        %v373 = vld [vmem:[#allocation5 + $0x290] sm:$0xff]
        %v374 = vld [vmem:[#allocation5 + $0x298] sm:$0xff]
        %v375 = vld [vmem:[#allocation5 + $0x2a0] sm:$0xff]
        %v376 = vld [vmem:[#allocation5 + $0x2a8] sm:$0xff]
        %v377 = vld [vmem:[#allocation5 + $0x2b0] sm:$0xff]
        %v378 = vld [vmem:[#allocation5 + $0x2b8] sm:$0xff]
        %v379 = vld [vmem:[#allocation5 + $0x2c0] sm:$0xff]
        %v380 = vld [vmem:[#allocation5 + $0x2c8] sm:$0xff]
        %v381 = vld [vmem:[#allocation5 + $0x2d0] sm:$0xff]
        %v382 = vld [vmem:[#allocation5 + $0x2d8] sm:$0xff]
        %v383 = vld [vmem:[#allocation5 + $0x2e0] sm:$0xff]
        %v384 = vld [vmem:[#allocation5 + $0x2e8] sm:$0xff]
        %v385 = vld [vmem:[#allocation5 + $0x2f0] sm:$0xff]
        %v386 = vld [vmem:[#allocation5 + $0x2f8] sm:$0xff]
        %v387 = vld [vmem:[#allocation5 + $0x300] sm:$0xff]
        %v388 = vld [vmem:[#allocation5 + $0x308] sm:$0xff]
        %v389 = vld [vmem:[#allocation5 + $0x310] sm:$0xff]
        %v390 = vld [vmem:[#allocation5 + $0x318] sm:$0xff]
        %v391 = vld [vmem:[#allocation5 + $0x320] sm:$0xff]
        %v392 = vld [vmem:[#allocation5 + $0x328] sm:$0xff]
        %v393 = vld [vmem:[#allocation5 + $0x330] sm:$0xff]
        %v394 = vld [vmem:[#allocation5 + $0x338] sm:$0xff]
        %v395 = vld [vmem:[#allocation5 + $0x340] sm:$0xff]
        %v396 = vld [vmem:[#allocation5 + $0x348] sm:$0xff]
        %v397 = vld [vmem:[#allocation5 + $0x350] sm:$0xff]
        %v398 = vld [vmem:[#allocation5 + $0x358] sm:$0xff]
        %v399 = vld [vmem:[#allocation5 + $0x360] sm:$0xff]
        %v400 = vld [vmem:[#allocation5 + $0x368] sm:$0xff]
        %v401 = vld [vmem:[#allocation5 + $0x370] sm:$0xff]
        %v402 = vld [vmem:[#allocation5 + $0x378] sm:$0xff]
        %v403 = vld [vmem:[#allocation5 + $0x380] sm:$0xff]
        %v404 = vld [vmem:[#allocation5 + $0x388] sm:$0xff]
        %v405 = vld [vmem:[#allocation5 + $0x390] sm:$0xff]
        %v406 = vld [vmem:[#allocation5 + $0x398] sm:$0xff]
        %v407 = vld [vmem:[#allocation5 + $0x3a0] sm:$0xff]
        %v408 = vld [vmem:[#allocation5 + $0x3a8] sm:$0xff]
        %v409 = vld [vmem:[#allocation5 + $0x3b0] sm:$0xff]
        %v410 = vld [vmem:[#allocation5 + $0x3b8] sm:$0xff]
        %v411 = vld [vmem:[#allocation5 + $0x3c0] sm:$0xff]
        %v412 = vld [vmem:[#allocation5 + $0x3c8] sm:$0xff]
        %v413 = vld [vmem:[#allocation5 + $0x3d0] sm:$0xff]
        %v414 = vld [vmem:[#allocation5 + $0x3d8] sm:$0xff]
        %v415 = vld [vmem:[#allocation5 + $0x3e0] sm:$0xff]
        %v416 = vld [vmem:[#allocation5 + $0x3e8] sm:$0xff]
        %v417 = vld [vmem:[#allocation5 + $0x3f0] sm:$0xff]
        %v418 = vld [vmem:[#allocation5 + $0x3f8] sm:$0xff]
        %v419 = vld [vmem:[#allocation7] sm:$0xff]
        %v420 = vld [vmem:[#allocation7 + $0x8] sm:$0xff]
        %v423 = vlaneseq
        %v424 = vshrl.u32 %v423, 7
        %v425 = vsub.s32 0, %v424
        %v426 = vrot.slane %v419, %v425
        %v427 = vlaneseq
        %v428 = vshrl.u32 %v427, 7
        %v429 = vsub.s32 1, %v428
        %v430 = vrot.slane %v419, %v429
        %v431 = vlaneseq
        %v432 = vshrl.u32 %v431, 7
        %v433 = vsub.s32 2, %v432
        %v434 = vrot.slane %v419, %v433
        %v435 = vlaneseq
        %v436 = vshrl.u32 %v435, 7
        %v437 = vsub.s32 3, %v436
        %v438 = vrot.slane %v419, %v437
        %v439 = vlaneseq
        %v440 = vshrl.u32 %v439, 7
        %v441 = vsub.s32 4, %v440
        %v442 = vrot.slane %v419, %v441
        %v443 = vlaneseq
        %v444 = vshrl.u32 %v443, 7
        %v445 = vsub.s32 5, %v444
        %v446 = vrot.slane %v419, %v445
        %v447 = vlaneseq
        %v448 = vshrl.u32 %v447, 7
        %v449 = vsub.s32 6, %v448
        %v450 = vrot.slane %v419, %v449
        %v451 = vlaneseq
        %v452 = vshrl.u32 %v451, 7
        %v453 = vsub.s32 7, %v452
        %v454 = vrot.slane %v419, %v453
        %v455 = vlaneseq
        %v456 = vshrl.u32 %v455, 7
        %v457 = vsub.s32 0, %v456
        %v458 = vrot.slane %v420, %v457
        %v459 = vlaneseq
        %v460 = vshrl.u32 %v459, 7
        %v461 = vsub.s32 1, %v460
        %v462 = vrot.slane %v420, %v461
        %v463 = vlaneseq
        %v464 = vshrl.u32 %v463, 7
        %v465 = vsub.s32 2, %v464
        %v466 = vrot.slane %v420, %v465
        %v467 = vlaneseq
        %v468 = vshrl.u32 %v467, 7
        %v469 = vsub.s32 3, %v468
        %v470 = vrot.slane %v420, %v469
        %v471 = vlaneseq
        %v472 = vshrl.u32 %v471, 7
        %v473 = vsub.s32 4, %v472
        %v474 = vrot.slane %v420, %v473
        %v475 = vlaneseq
        %v476 = vshrl.u32 %v475, 7
        %v477 = vsub.s32 5, %v476
        %v478 = vrot.slane %v420, %v477
        %v479 = vlaneseq
        %v480 = vshrl.u32 %v479, 7
        %v481 = vsub.s32 6, %v480
        %v482 = vrot.slane %v420, %v481
        %v483 = vlaneseq
        %v484 = vshrl.u32 %v483, 7
        %v485 = vsub.s32 7, %v484
        %v486 = vrot.slane %v420, %v485
        %v631 = vunpack.c.l.b16 %v291
        %v632 = vunpack.c.h.b16 %v291
        %v633 = vunpack.c.l.b16 %v292
        %v634 = vunpack.c.h.b16 %v292
        %v635 = vunpack.c.l.b16 %v293
        %v636 = vunpack.c.h.b16 %v293
        %v637 = vunpack.c.l.b16 %v294
        %v638 = vunpack.c.h.b16 %v294
        %v639 = vunpack.c.l.b16 %v295
        %v640 = vunpack.c.h.b16 %v295
        %v641 = vunpack.c.l.b16 %v296
        %v642 = vunpack.c.h.b16 %v296
        %v643 = vunpack.c.l.b16 %v297
        %v644 = vunpack.c.h.b16 %v297
        %v645 = vunpack.c.l.b16 %v298
        %v646 = vunpack.c.h.b16 %v298
        %v647 = vunpack.c.l.b16 %v299
        %v648 = vunpack.c.h.b16 %v299
        %v649 = vunpack.c.l.b16 %v300
        %v650 = vunpack.c.h.b16 %v300
        %v651 = vunpack.c.l.b16 %v301
        %v652 = vunpack.c.h.b16 %v301
        %v653 = vunpack.c.l.b16 %v302
        %v654 = vunpack.c.h.b16 %v302
        %v655 = vunpack.c.l.b16 %v303
        %v656 = vunpack.c.h.b16 %v303
        %v657 = vunpack.c.l.b16 %v304
        %v658 = vunpack.c.h.b16 %v304
        %v659 = vunpack.c.l.b16 %v305
        %v660 = vunpack.c.h.b16 %v305
        %v661 = vunpack.c.l.b16 %v306
        %v662 = vunpack.c.h.b16 %v306
        %v663 = vunpack.c.l.b16 %v307
        %v664 = vunpack.c.h.b16 %v307
        %v665 = vunpack.c.l.b16 %v308
        %v666 = vunpack.c.h.b16 %v308
        %v667 = vunpack.c.l.b16 %v309
        %v668 = vunpack.c.h.b16 %v309
        %v669 = vunpack.c.l.b16 %v310
        %v670 = vunpack.c.h.b16 %v310
        %v671 = vunpack.c.l.b16 %v311
        %v672 = vunpack.c.h.b16 %v311
        %v673 = vunpack.c.l.b16 %v312
        %v674 = vunpack.c.h.b16 %v312
        %v675 = vunpack.c.l.b16 %v313
        %v676 = vunpack.c.h.b16 %v313
        %v677 = vunpack.c.l.b16 %v314
        %v678 = vunpack.c.h.b16 %v314
        %v679 = vunpack.c.l.b16 %v315
        %v680 = vunpack.c.h.b16 %v315
        %v681 = vunpack.c.l.b16 %v316
        %v682 = vunpack.c.h.b16 %v316
        %v683 = vunpack.c.l.b16 %v317
        %v684 = vunpack.c.h.b16 %v317
        %v685 = vunpack.c.l.b16 %v318
        %v686 = vunpack.c.h.b16 %v318
        %v687 = vunpack.c.l.b16 %v319
        %v688 = vunpack.c.h.b16 %v319
        %v689 = vunpack.c.l.b16 %v320
        %v690 = vunpack.c.h.b16 %v320
        %v691 = vunpack.c.l.b16 %v321
        %v692 = vunpack.c.h.b16 %v321
        %v693 = vunpack.c.l.b16 %v322
        %v694 = vunpack.c.h.b16 %v322
        %v695 = vunpack.c.l.b16 %v323
        %v696 = vunpack.c.h.b16 %v323
        %v697 = vunpack.c.l.b16 %v324
        %v698 = vunpack.c.h.b16 %v324
        %v699 = vunpack.c.l.b16 %v325
        %v700 = vunpack.c.h.b16 %v325
        %v701 = vunpack.c.l.b16 %v326
        %v702 = vunpack.c.h.b16 %v326
        %v703 = vunpack.c.l.b16 %v327
        %v704 = vunpack.c.h.b16 %v327
        %v705 = vunpack.c.l.b16 %v328
        %v706 = vunpack.c.h.b16 %v328
        %v707 = vunpack.c.l.b16 %v329
        %v708 = vunpack.c.h.b16 %v329
        %v709 = vunpack.c.l.b16 %v330
        %v710 = vunpack.c.h.b16 %v330
        %v711 = vunpack.c.l.b16 %v331
        %v712 = vunpack.c.h.b16 %v331
        %v713 = vunpack.c.l.b16 %v332
        %v714 = vunpack.c.h.b16 %v332
        %v715 = vunpack.c.l.b16 %v333
        %v716 = vunpack.c.h.b16 %v333
        %v717 = vunpack.c.l.b16 %v334
        %v718 = vunpack.c.h.b16 %v334
        %v719 = vunpack.c.l.b16 %v335
        %v720 = vunpack.c.h.b16 %v335
        %v721 = vunpack.c.l.b16 %v336
        %v722 = vunpack.c.h.b16 %v336
        %v723 = vunpack.c.l.b16 %v337
        %v724 = vunpack.c.h.b16 %v337
        %v725 = vunpack.c.l.b16 %v338
        %v726 = vunpack.c.h.b16 %v338
        %v727 = vunpack.c.l.b16 %v339
        %v728 = vunpack.c.h.b16 %v339
        %v729 = vunpack.c.l.b16 %v340
        %v730 = vunpack.c.h.b16 %v340
        %v731 = vunpack.c.l.b16 %v341
        %v732 = vunpack.c.h.b16 %v341
        %v733 = vunpack.c.l.b16 %v342
        %v734 = vunpack.c.h.b16 %v342
        %v735 = vunpack.c.l.b16 %v343
        %v736 = vunpack.c.h.b16 %v343
        %v737 = vunpack.c.l.b16 %v344
        %v738 = vunpack.c.h.b16 %v344
        %v739 = vunpack.c.l.b16 %v345
        %v740 = vunpack.c.h.b16 %v345
        %v741 = vunpack.c.l.b16 %v346
        %v742 = vunpack.c.h.b16 %v346
        %v743 = vunpack.c.l.b16 %v347
        %v744 = vunpack.c.h.b16 %v347
        %v745 = vunpack.c.l.b16 %v348
        %v746 = vunpack.c.h.b16 %v348
        %v747 = vunpack.c.l.b16 %v349
        %v748 = vunpack.c.h.b16 %v349
        %v749 = vunpack.c.l.b16 %v350
        %v750 = vunpack.c.h.b16 %v350
        %v751 = vunpack.c.l.b16 %v351
        %v752 = vunpack.c.h.b16 %v351
        %v753 = vunpack.c.l.b16 %v352
        %v754 = vunpack.c.h.b16 %v352
        %v755 = vunpack.c.l.b16 %v353
        %v756 = vunpack.c.h.b16 %v353
        %v757 = vunpack.c.l.b16 %v354
        %v758 = vunpack.c.h.b16 %v354
        %v759 = vunpack.c.l.b16 %v355
        %v760 = vunpack.c.h.b16 %v355
        %v761 = vunpack.c.l.b16 %v356
        %v762 = vunpack.c.h.b16 %v356
        %v763 = vunpack.c.l.b16 %v357
        %v764 = vunpack.c.h.b16 %v357
        %v765 = vunpack.c.l.b16 %v358
        %v766 = vunpack.c.h.b16 %v358
        %v767 = vunpack.c.l.b16 %v359
        %v768 = vunpack.c.h.b16 %v359
        %v769 = vunpack.c.l.b16 %v360
        %v770 = vunpack.c.h.b16 %v360
        %v771 = vunpack.c.l.b16 %v361
        %v772 = vunpack.c.h.b16 %v361
        %v773 = vunpack.c.l.b16 %v362
        %v774 = vunpack.c.h.b16 %v362
        %v775 = vunpack.c.l.b16 %v363
        %v776 = vunpack.c.h.b16 %v363
        %v777 = vunpack.c.l.b16 %v364
        %v778 = vunpack.c.h.b16 %v364
        %v779 = vunpack.c.l.b16 %v365
        %v780 = vunpack.c.h.b16 %v365
        %v781 = vunpack.c.l.b16 %v366
        %v782 = vunpack.c.h.b16 %v366
        %v783 = vunpack.c.l.b16 %v367
        %v784 = vunpack.c.h.b16 %v367
        %v785 = vunpack.c.l.b16 %v368
        %v786 = vunpack.c.h.b16 %v368
        %v787 = vunpack.c.l.b16 %v369
        %v788 = vunpack.c.h.b16 %v369
        %v789 = vunpack.c.l.b16 %v370
        %v790 = vunpack.c.h.b16 %v370
        %v791 = vunpack.c.l.b16 %v371
        %v792 = vunpack.c.h.b16 %v371
        %v793 = vunpack.c.l.b16 %v372
        %v794 = vunpack.c.h.b16 %v372
        %v795 = vunpack.c.l.b16 %v373
        %v796 = vunpack.c.h.b16 %v373
        %v797 = vunpack.c.l.b16 %v374
        %v798 = vunpack.c.h.b16 %v374
        %v799 = vunpack.c.l.b16 %v375
        %v800 = vunpack.c.h.b16 %v375
        %v801 = vunpack.c.l.b16 %v376
        %v802 = vunpack.c.h.b16 %v376
        %v803 = vunpack.c.l.b16 %v377
        %v804 = vunpack.c.h.b16 %v377
        %v805 = vunpack.c.l.b16 %v378
        %v806 = vunpack.c.h.b16 %v378
        %v807 = vunpack.c.l.b16 %v379
        %v808 = vunpack.c.h.b16 %v379
        %v809 = vunpack.c.l.b16 %v380
        %v810 = vunpack.c.h.b16 %v380
        %v811 = vunpack.c.l.b16 %v381
        %v812 = vunpack.c.h.b16 %v381
        %v813 = vunpack.c.l.b16 %v382
        %v814 = vunpack.c.h.b16 %v382
        %v815 = vunpack.c.l.b16 %v383
        %v816 = vunpack.c.h.b16 %v383
        %v817 = vunpack.c.l.b16 %v384
        %v818 = vunpack.c.h.b16 %v384
        %v819 = vunpack.c.l.b16 %v385
        %v820 = vunpack.c.h.b16 %v385
        %v821 = vunpack.c.l.b16 %v386
        %v822 = vunpack.c.h.b16 %v386
        %v823 = vunpack.c.l.b16 %v387
        %v824 = vunpack.c.h.b16 %v387
        %v825 = vunpack.c.l.b16 %v388
        %v826 = vunpack.c.h.b16 %v388
        %v827 = vunpack.c.l.b16 %v389
        %v828 = vunpack.c.h.b16 %v389
        %v829 = vunpack.c.l.b16 %v390
        %v830 = vunpack.c.h.b16 %v390
        %v831 = vunpack.c.l.b16 %v391
        %v832 = vunpack.c.h.b16 %v391
        %v833 = vunpack.c.l.b16 %v392
        %v834 = vunpack.c.h.b16 %v392
        %v835 = vunpack.c.l.b16 %v393
        %v836 = vunpack.c.h.b16 %v393
        %v837 = vunpack.c.l.b16 %v394
        %v838 = vunpack.c.h.b16 %v394
        %v839 = vunpack.c.l.b16 %v395
        %v840 = vunpack.c.h.b16 %v395
        %v841 = vunpack.c.l.b16 %v396
        %v842 = vunpack.c.h.b16 %v396
        %v843 = vunpack.c.l.b16 %v397
        %v844 = vunpack.c.h.b16 %v397
        %v845 = vunpack.c.l.b16 %v398
        %v846 = vunpack.c.h.b16 %v398
        %v847 = vunpack.c.l.b16 %v399
        %v848 = vunpack.c.h.b16 %v399
        %v849 = vunpack.c.l.b16 %v400
        %v850 = vunpack.c.h.b16 %v400
        %v851 = vunpack.c.l.b16 %v401
        %v852 = vunpack.c.h.b16 %v401
        %v853 = vunpack.c.l.b16 %v402
        %v854 = vunpack.c.h.b16 %v402
        %v855 = vunpack.c.l.b16 %v403
        %v856 = vunpack.c.h.b16 %v403
        %v857 = vunpack.c.l.b16 %v404
        %v858 = vunpack.c.h.b16 %v404
        %v859 = vunpack.c.l.b16 %v405
        %v860 = vunpack.c.h.b16 %v405
        %v861 = vunpack.c.l.b16 %v406
        %v862 = vunpack.c.h.b16 %v406
        %v863 = vunpack.c.l.b16 %v407
        %v864 = vunpack.c.h.b16 %v407
        %v865 = vunpack.c.l.b16 %v408
        %v866 = vunpack.c.h.b16 %v408
        %v867 = vunpack.c.l.b16 %v409
        %v868 = vunpack.c.h.b16 %v409
        %v869 = vunpack.c.l.b16 %v410
        %v870 = vunpack.c.h.b16 %v410
        %v871 = vunpack.c.l.b16 %v411
        %v872 = vunpack.c.h.b16 %v411
        %v873 = vunpack.c.l.b16 %v412
        %v874 = vunpack.c.h.b16 %v412
        %v875 = vunpack.c.l.b16 %v413
        %v876 = vunpack.c.h.b16 %v413
        %v877 = vunpack.c.l.b16 %v414
        %v878 = vunpack.c.h.b16 %v414
        %v879 = vunpack.c.l.b16 %v415
        %v880 = vunpack.c.h.b16 %v415
        %v881 = vunpack.c.l.b16 %v416
        %v882 = vunpack.c.h.b16 %v416
        %v883 = vunpack.c.l.b16 %v417
        %v884 = vunpack.c.h.b16 %v417
        %v885 = vunpack.c.l.b16 %v418
        %v886 = vunpack.c.h.b16 %v418
        %v887 = vpack.c.b16 %v647, %v631
        %v888 = vpack.c.b16 %v648, %v632
        %v889 = vpack.c.b16 %v649, %v633
        %v890 = vpack.c.b16 %v650, %v634
        %v891 = vpack.c.b16 %v651, %v635
        %v892 = vpack.c.b16 %v652, %v636
        %v893 = vpack.c.b16 %v653, %v637
        %v894 = vpack.c.b16 %v654, %v638
        %v895 = vpack.c.b16 %v655, %v639
        %v896 = vpack.c.b16 %v656, %v640
        %v897 = vpack.c.b16 %v657, %v641
        %v898 = vpack.c.b16 %v658, %v642
        %v899 = vpack.c.b16 %v659, %v643
        %v900 = vpack.c.b16 %v660, %v644
        %v901 = vpack.c.b16 %v661, %v645
        %v902 = vpack.c.b16 %v662, %v646
        %v903 = vpack.c.b16 %v679, %v663
        %v904 = vpack.c.b16 %v680, %v664
        %v905 = vpack.c.b16 %v681, %v665
        %v906 = vpack.c.b16 %v682, %v666
        %v907 = vpack.c.b16 %v683, %v667
        %v908 = vpack.c.b16 %v684, %v668
        %v909 = vpack.c.b16 %v685, %v669
        %v910 = vpack.c.b16 %v686, %v670
        %v911 = vpack.c.b16 %v687, %v671
        %v912 = vpack.c.b16 %v688, %v672
        %v913 = vpack.c.b16 %v689, %v673
        %v914 = vpack.c.b16 %v690, %v674
        %v915 = vpack.c.b16 %v691, %v675
        %v916 = vpack.c.b16 %v692, %v676
        %v917 = vpack.c.b16 %v693, %v677
        %v918 = vpack.c.b16 %v694, %v678
        %v919 = vpack.c.b16 %v711, %v695
        %v920 = vpack.c.b16 %v712, %v696
        %v921 = vpack.c.b16 %v713, %v697
        %v922 = vpack.c.b16 %v714, %v698
        %v923 = vpack.c.b16 %v715, %v699
        %v924 = vpack.c.b16 %v716, %v700
        %v925 = vpack.c.b16 %v717, %v701
        %v926 = vpack.c.b16 %v718, %v702
        %v927 = vpack.c.b16 %v719, %v703
        %v928 = vpack.c.b16 %v720, %v704
        %v929 = vpack.c.b16 %v721, %v705
        %v930 = vpack.c.b16 %v722, %v706
        %v931 = vpack.c.b16 %v723, %v707
        %v932 = vpack.c.b16 %v724, %v708
        %v933 = vpack.c.b16 %v725, %v709
        %v934 = vpack.c.b16 %v726, %v710
        %v935 = vpack.c.b16 %v743, %v727
        %v936 = vpack.c.b16 %v744, %v728
        %v937 = vpack.c.b16 %v745, %v729
        %v938 = vpack.c.b16 %v746, %v730
        %v939 = vpack.c.b16 %v747, %v731
        %v940 = vpack.c.b16 %v748, %v732
        %v941 = vpack.c.b16 %v749, %v733
        %v942 = vpack.c.b16 %v750, %v734
        %v943 = vpack.c.b16 %v751, %v735
        %v944 = vpack.c.b16 %v752, %v736
        %v945 = vpack.c.b16 %v753, %v737
        %v946 = vpack.c.b16 %v754, %v738
        %v947 = vpack.c.b16 %v755, %v739
        %v948 = vpack.c.b16 %v756, %v740
        %v949 = vpack.c.b16 %v757, %v741
        %v950 = vpack.c.b16 %v758, %v742
        %v951 = vpack.c.b16 %v775, %v759
        %v952 = vpack.c.b16 %v776, %v760
        %v953 = vpack.c.b16 %v777, %v761
        %v954 = vpack.c.b16 %v778, %v762
        %v955 = vpack.c.b16 %v779, %v763
        %v956 = vpack.c.b16 %v780, %v764
        %v957 = vpack.c.b16 %v781, %v765
        %v958 = vpack.c.b16 %v782, %v766
        %v959 = vpack.c.b16 %v783, %v767
        %v960 = vpack.c.b16 %v784, %v768
        %v961 = vpack.c.b16 %v785, %v769
        %v962 = vpack.c.b16 %v786, %v770
        %v963 = vpack.c.b16 %v787, %v771
        %v964 = vpack.c.b16 %v788, %v772
        %v965 = vpack.c.b16 %v789, %v773
        %v966 = vpack.c.b16 %v790, %v774
        %v967 = vpack.c.b16 %v807, %v791
        %v968 = vpack.c.b16 %v808, %v792
        %v969 = vpack.c.b16 %v809, %v793
        %v970 = vpack.c.b16 %v810, %v794
        %v971 = vpack.c.b16 %v811, %v795
        %v972 = vpack.c.b16 %v812, %v796
        %v973 = vpack.c.b16 %v813, %v797
        %v974 = vpack.c.b16 %v814, %v798
        %v975 = vpack.c.b16 %v815, %v799
        %v976 = vpack.c.b16 %v816, %v800
        %v977 = vpack.c.b16 %v817, %v801
        %v978 = vpack.c.b16 %v818, %v802
        %v979 = vpack.c.b16 %v819, %v803
        %v980 = vpack.c.b16 %v820, %v804
        %v981 = vpack.c.b16 %v821, %v805
        %v982 = vpack.c.b16 %v822, %v806
        %v983 = vpack.c.b16 %v839, %v823
        %v984 = vpack.c.b16 %v840, %v824
        %v985 = vpack.c.b16 %v841, %v825
        %v986 = vpack.c.b16 %v842, %v826
        %v987 = vpack.c.b16 %v843, %v827
        %v988 = vpack.c.b16 %v844, %v828
        %v989 = vpack.c.b16 %v845, %v829
        %v990 = vpack.c.b16 %v846, %v830
        %v991 = vpack.c.b16 %v847, %v831
        %v992 = vpack.c.b16 %v848, %v832
        %v993 = vpack.c.b16 %v849, %v833
        %v994 = vpack.c.b16 %v850, %v834
        %v995 = vpack.c.b16 %v851, %v835
        %v996 = vpack.c.b16 %v852, %v836
        %v997 = vpack.c.b16 %v853, %v837
        %v998 = vpack.c.b16 %v854, %v838
        %v999 = vpack.c.b16 %v871, %v855
        %v1000 = vpack.c.b16 %v872, %v856
        %v1001 = vpack.c.b16 %v873, %v857
        %v1002 = vpack.c.b16 %v874, %v858
        %v1003 = vpack.c.b16 %v875, %v859
        %v1004 = vpack.c.b16 %v876, %v860
        %v1005 = vpack.c.b16 %v877, %v861
        %v1006 = vpack.c.b16 %v878, %v862
        %v1007 = vpack.c.b16 %v879, %v863
        %v1008 = vpack.c.b16 %v880, %v864
        %v1009 = vpack.c.b16 %v881, %v865
        %v1010 = vpack.c.b16 %v882, %v866
        %v1011 = vpack.c.b16 %v883, %v867
        %v1012 = vpack.c.b16 %v884, %v868
        %v1013 = vpack.c.b16 %v885, %v869
        %v1014 = vpack.c.b16 %v886, %v870
        %1143 = vmatprep.subr.bf16.mxu0 %v888
        %1144 = vmatpush1.bf16.msra.mxu0 %v887
        %1145 = vmatprep.subr.bf16.mxu0 %v904
        %1146 = vmatpush1.bf16.msra.mxu0 %v903
        %1147 = vmatprep.subr.bf16.mxu0 %v920
        %1148 = vmatpush1.bf16.msra.mxu0 %v919
        %1149 = vmatprep.subr.bf16.mxu0 %v936
        %1150 = vmatpush1.bf16.msra.mxu0 %v935
        %1151 = vmatprep.subr.bf16.mxu0 %v952
        %1152 = vmatpush1.bf16.msra.mxu0 %v951
        %1153 = vmatprep.subr.bf16.mxu0 %v968
        %1154 = vmatpush1.bf16.msra.mxu0 %v967
        %1155 = vmatprep.subr.bf16.mxu0 %v984
        %1156 = vmatpush1.bf16.msra.mxu0 %v983
        %1157 = vmatprep.subr.bf16.mxu0 %v1000
        %1158 = vmatpush1.bf16.msra.mxu0 %v999
        %1159 = vmatprep.subr.bf16.mxu0 0
        %1160 = vmatpush1.bf16.msra.mxu0 0
        %1161 = vmatprep.subr.bf16.mxu0 0
        %1162 = vmatpush1.bf16.msra.mxu0 0
        %1163 = vmatprep.subr.bf16.mxu0 0
        %1164 = vmatpush1.bf16.msra.mxu0 0
        %1165 = vmatprep.subr.bf16.mxu0 0
        %1166 = vmatpush1.bf16.msra.mxu0 0
        %1167 = vmatprep.subr.bf16.mxu0 0
        %1168 = vmatpush1.bf16.msra.mxu0 0
        %1169 = vmatprep.subr.bf16.mxu0 0
        %1170 = vmatpush1.bf16.msra.mxu0 0
        %1171 = vmatprep.subr.bf16.mxu0 0
        %1172 = vmatpush1.bf16.msra.mxu0 0
        %1173 = vmatprep.subr.bf16.mxu0 0
        %1174 = vmatpush1.bf16.msra.mxu0 0
        %1175 = vmatprep.mubr.bf16.mxu0 0
        %1176 = vmatmul.mubr.bf16.gmra.mrb[0].mxu0 %v290
        %v1177 = vpop.f32.mrb[0].mxu0
        %v1178 = vadd.f32 %v426, %v1177
        %v1179 = vpop.f32.mrb[0].mxu0
        %v1180 = vadd.f32 %v430, %v1179
        %v1181 = vpop.f32.mrb[0].mxu0
        %v1182 = vadd.f32 %v426, %v1181
        %v1183 = vpop.f32.mrb[0].mxu0
        %v1184 = vadd.f32 %v430, %v1183
        %1185 = vdwg.mxu0
        %1186 = vmatprep.subr.bf16.mxu0 %v890
        %1187 = vmatpush1.bf16.msra.mxu0 %v889
        %1188 = vmatprep.subr.bf16.mxu0 %v906
        %1189 = vmatpush1.bf16.msra.mxu0 %v905
        %1190 = vmatprep.subr.bf16.mxu0 %v922
        %1191 = vmatpush1.bf16.msra.mxu0 %v921
        %1192 = vmatprep.subr.bf16.mxu0 %v938
        %1193 = vmatpush1.bf16.msra.mxu0 %v937
        %1194 = vmatprep.subr.bf16.mxu0 %v954
        %1195 = vmatpush1.bf16.msra.mxu0 %v953
        %1196 = vmatprep.subr.bf16.mxu0 %v970
        %1197 = vmatpush1.bf16.msra.mxu0 %v969
        %1198 = vmatprep.subr.bf16.mxu0 %v986
        %1199 = vmatpush1.bf16.msra.mxu0 %v985
        %1200 = vmatprep.subr.bf16.mxu0 %v1002
        %1201 = vmatpush1.bf16.msra.mxu0 %v1001
        %1202 = vmatprep.subr.bf16.mxu0 0
        %1203 = vmatpush1.bf16.msra.mxu0 0
        %1204 = vmatprep.subr.bf16.mxu0 0
        %1205 = vmatpush1.bf16.msra.mxu0 0
        %1206 = vmatprep.subr.bf16.mxu0 0
        %1207 = vmatpush1.bf16.msra.mxu0 0
        %1208 = vmatprep.subr.bf16.mxu0 0
        %1209 = vmatpush1.bf16.msra.mxu0 0
        %1210 = vmatprep.subr.bf16.mxu0 0
        %1211 = vmatpush1.bf16.msra.mxu0 0
        %1212 = vmatprep.subr.bf16.mxu0 0
        %1213 = vmatpush1.bf16.msra.mxu0 0
        %1214 = vmatprep.subr.bf16.mxu0 0
        %1215 = vmatpush1.bf16.msra.mxu0 0
        %1216 = vmatprep.subr.bf16.mxu0 0
        %1217 = vmatpush1.bf16.msra.mxu0 0
        %1218 = vmatprep.mubr.bf16.mxu0 0
        %1219 = vmatmul.mubr.bf16.gmra.mrb[0].mxu0 %v290
        %v1220 = vpop.f32.mrb[0].mxu0
        %v1221 = vadd.f32 %v434, %v1220
        %v1222 = vpop.f32.mrb[0].mxu0
        %v1223 = vadd.f32 %v438, %v1222
        %v1224 = vpop.f32.mrb[0].mxu0
        %v1225 = vadd.f32 %v434, %v1224
        %v1226 = vpop.f32.mrb[0].mxu0
        %v1227 = vadd.f32 %v438, %v1226
        %1228 = vdwg.mxu0
        %1229 = vmatprep.subr.bf16.mxu0 %v892
        %1230 = vmatpush1.bf16.msra.mxu0 %v891
        %1231 = vmatprep.subr.bf16.mxu0 %v908
        %1232 = vmatpush1.bf16.msra.mxu0 %v907
        %1233 = vmatprep.subr.bf16.mxu0 %v924
        %1234 = vmatpush1.bf16.msra.mxu0 %v923
        %1235 = vmatprep.subr.bf16.mxu0 %v940
        %1236 = vmatpush1.bf16.msra.mxu0 %v939
        %1237 = vmatprep.subr.bf16.mxu0 %v956
        %1238 = vmatpush1.bf16.msra.mxu0 %v955
        %1239 = vmatprep.subr.bf16.mxu0 %v972
        %1240 = vmatpush1.bf16.msra.mxu0 %v971
        %1241 = vmatprep.subr.bf16.mxu0 %v988
        %1242 = vmatpush1.bf16.msra.mxu0 %v987
        %1243 = vmatprep.subr.bf16.mxu0 %v1004
        %1244 = vmatpush1.bf16.msra.mxu0 %v1003
        %1245 = vmatprep.subr.bf16.mxu0 0
        %1246 = vmatpush1.bf16.msra.mxu0 0
        %1247 = vmatprep.subr.bf16.mxu0 0
        %1248 = vmatpush1.bf16.msra.mxu0 0
        %1249 = vmatprep.subr.bf16.mxu0 0
        %1250 = vmatpush1.bf16.msra.mxu0 0
        %1251 = vmatprep.subr.bf16.mxu0 0
        %1252 = vmatpush1.bf16.msra.mxu0 0
        %1253 = vmatprep.subr.bf16.mxu0 0
        %1254 = vmatpush1.bf16.msra.mxu0 0
        %1255 = vmatprep.subr.bf16.mxu0 0
        %1256 = vmatpush1.bf16.msra.mxu0 0
        %1257 = vmatprep.subr.bf16.mxu0 0
        %1258 = vmatpush1.bf16.msra.mxu0 0
        %1259 = vmatprep.subr.bf16.mxu0 0
        %1260 = vmatpush1.bf16.msra.mxu0 0
        %1261 = vmatprep.mubr.bf16.mxu0 0
        %1262 = vmatmul.mubr.bf16.gmra.mrb[0].mxu0 %v290
        %v1263 = vpop.f32.mrb[0].mxu0
        %v1264 = vadd.f32 %v442, %v1263
        %v1265 = vpop.f32.mrb[0].mxu0
        %v1266 = vadd.f32 %v446, %v1265
        %v1267 = vpop.f32.mrb[0].mxu0
        %v1268 = vadd.f32 %v442, %v1267
        %v1269 = vpop.f32.mrb[0].mxu0
        %v1270 = vadd.f32 %v446, %v1269
        %1271 = vdwg.mxu0
        %1272 = vmatprep.subr.bf16.mxu0 %v894
        %1273 = vmatpush1.bf16.msra.mxu0 %v893
        %1274 = vmatprep.subr.bf16.mxu0 %v910
        %1275 = vmatpush1.bf16.msra.mxu0 %v909
        %1276 = vmatprep.subr.bf16.mxu0 %v926
        %1277 = vmatpush1.bf16.msra.mxu0 %v925
        %1278 = vmatprep.subr.bf16.mxu0 %v942
        %1279 = vmatpush1.bf16.msra.mxu0 %v941
        %1280 = vmatprep.subr.bf16.mxu0 %v958
        %1281 = vmatpush1.bf16.msra.mxu0 %v957
        %1282 = vmatprep.subr.bf16.mxu0 %v974
        %1283 = vmatpush1.bf16.msra.mxu0 %v973
        %1284 = vmatprep.subr.bf16.mxu0 %v990
        %1285 = vmatpush1.bf16.msra.mxu0 %v989
        %1286 = vmatprep.subr.bf16.mxu0 %v1006
        %1287 = vmatpush1.bf16.msra.mxu0 %v1005
        %1288 = vmatprep.subr.bf16.mxu0 0
        %1289 = vmatpush1.bf16.msra.mxu0 0
        %1290 = vmatprep.subr.bf16.mxu0 0
        %1291 = vmatpush1.bf16.msra.mxu0 0
        %1292 = vmatprep.subr.bf16.mxu0 0
        %1293 = vmatpush1.bf16.msra.mxu0 0
        %1294 = vmatprep.subr.bf16.mxu0 0
        %1295 = vmatpush1.bf16.msra.mxu0 0
        %1296 = vmatprep.subr.bf16.mxu0 0
        %1297 = vmatpush1.bf16.msra.mxu0 0
        %1298 = vmatprep.subr.bf16.mxu0 0
        %1299 = vmatpush1.bf16.msra.mxu0 0
        %1300 = vmatprep.subr.bf16.mxu0 0
        %1301 = vmatpush1.bf16.msra.mxu0 0
        %1302 = vmatprep.subr.bf16.mxu0 0
        %1303 = vmatpush1.bf16.msra.mxu0 0
        %1304 = vmatprep.mubr.bf16.mxu0 0
        %1305 = vmatmul.mubr.bf16.gmra.mrb[0].mxu0 %v290
        %v1306 = vpop.f32.mrb[0].mxu0
        %v1307 = vadd.f32 %v450, %v1306
        %v1308 = vpop.f32.mrb[0].mxu0
        %v1309 = vadd.f32 %v454, %v1308
        %v1310 = vpop.f32.mrb[0].mxu0
        %v1311 = vadd.f32 %v450, %v1310
        %v1312 = vpop.f32.mrb[0].mxu0
        %v1313 = vadd.f32 %v454, %v1312
        %1314 = vdwg.mxu0
        %1315 = vmatprep.subr.bf16.mxu0 %v896
        %1316 = vmatpush1.bf16.msra.mxu0 %v895
        %1317 = vmatprep.subr.bf16.mxu0 %v912
        %1318 = vmatpush1.bf16.msra.mxu0 %v911
        %1319 = vmatprep.subr.bf16.mxu0 %v928
        %1320 = vmatpush1.bf16.msra.mxu0 %v927
        %1321 = vmatprep.subr.bf16.mxu0 %v944
        %1322 = vmatpush1.bf16.msra.mxu0 %v943
        %1323 = vmatprep.subr.bf16.mxu0 %v960
        %1324 = vmatpush1.bf16.msra.mxu0 %v959
        %1325 = vmatprep.subr.bf16.mxu0 %v976
        %1326 = vmatpush1.bf16.msra.mxu0 %v975
        %1327 = vmatprep.subr.bf16.mxu0 %v992
        %1328 = vmatpush1.bf16.msra.mxu0 %v991
        %1329 = vmatprep.subr.bf16.mxu0 %v1008
        %1330 = vmatpush1.bf16.msra.mxu0 %v1007
        %1331 = vmatprep.subr.bf16.mxu0 0
        %1332 = vmatpush1.bf16.msra.mxu0 0
        %1333 = vmatprep.subr.bf16.mxu0 0
        %1334 = vmatpush1.bf16.msra.mxu0 0
        %1335 = vmatprep.subr.bf16.mxu0 0
        %1336 = vmatpush1.bf16.msra.mxu0 0
        %1337 = vmatprep.subr.bf16.mxu0 0
        %1338 = vmatpush1.bf16.msra.mxu0 0
        %1339 = vmatprep.subr.bf16.mxu0 0
        %1340 = vmatpush1.bf16.msra.mxu0 0
        %1341 = vmatprep.subr.bf16.mxu0 0
        %1342 = vmatpush1.bf16.msra.mxu0 0
        %1343 = vmatprep.subr.bf16.mxu0 0
        %1344 = vmatpush1.bf16.msra.mxu0 0
        %1345 = vmatprep.subr.bf16.mxu0 0
        %1346 = vmatpush1.bf16.msra.mxu0 0
        %1347 = vmatprep.mubr.bf16.mxu0 0
        %1348 = vmatmul.mubr.bf16.gmra.mrb[0].mxu0 %v290
        %v1349 = vpop.f32.mrb[0].mxu0
        %v1350 = vadd.f32 %v458, %v1349
        %v1351 = vpop.f32.mrb[0].mxu0
        %v1352 = vadd.f32 %v462, %v1351
        %v1353 = vpop.f32.mrb[0].mxu0
        %v1354 = vadd.f32 %v458, %v1353
        %v1355 = vpop.f32.mrb[0].mxu0
        %v1356 = vadd.f32 %v462, %v1355
        %1357 = vdwg.mxu0
        %1358 = vmatprep.subr.bf16.mxu0 %v898
        %1359 = vmatpush1.bf16.msra.mxu0 %v897
        %1360 = vmatprep.subr.bf16.mxu0 %v914
        %1361 = vmatpush1.bf16.msra.mxu0 %v913
        %1362 = vmatprep.subr.bf16.mxu0 %v930
        %1363 = vmatpush1.bf16.msra.mxu0 %v929
        %1364 = vmatprep.subr.bf16.mxu0 %v946
        %1365 = vmatpush1.bf16.msra.mxu0 %v945
        %1366 = vmatprep.subr.bf16.mxu0 %v962
        %1367 = vmatpush1.bf16.msra.mxu0 %v961
        %1368 = vmatprep.subr.bf16.mxu0 %v978
        %1369 = vmatpush1.bf16.msra.mxu0 %v977
        %1370 = vmatprep.subr.bf16.mxu0 %v994
        %1371 = vmatpush1.bf16.msra.mxu0 %v993
        %1372 = vmatprep.subr.bf16.mxu0 %v1010
        %1373 = vmatpush1.bf16.msra.mxu0 %v1009
        %1374 = vmatprep.subr.bf16.mxu0 0
        %1375 = vmatpush1.bf16.msra.mxu0 0
        %1376 = vmatprep.subr.bf16.mxu0 0
        %1377 = vmatpush1.bf16.msra.mxu0 0
        %1378 = vmatprep.subr.bf16.mxu0 0
        %1379 = vmatpush1.bf16.msra.mxu0 0
        %1380 = vmatprep.subr.bf16.mxu0 0
        %1381 = vmatpush1.bf16.msra.mxu0 0
        %1382 = vmatprep.subr.bf16.mxu0 0
        %1383 = vmatpush1.bf16.msra.mxu0 0
        %1384 = vmatprep.subr.bf16.mxu0 0
        %1385 = vmatpush1.bf16.msra.mxu0 0
        %1386 = vmatprep.subr.bf16.mxu0 0
        %1387 = vmatpush1.bf16.msra.mxu0 0
        %1388 = vmatprep.subr.bf16.mxu0 0
        %1389 = vmatpush1.bf16.msra.mxu0 0
        %1390 = vmatprep.mubr.bf16.mxu0 0
        %1391 = vmatmul.mubr.bf16.gmra.mrb[0].mxu0 %v290
        %v1392 = vpop.f32.mrb[0].mxu0
        %v1393 = vadd.f32 %v466, %v1392
        %v1394 = vpop.f32.mrb[0].mxu0
        %v1395 = vadd.f32 %v470, %v1394
        %v1396 = vpop.f32.mrb[0].mxu0
        %v1397 = vadd.f32 %v466, %v1396
        %v1398 = vpop.f32.mrb[0].mxu0
        %v1399 = vadd.f32 %v470, %v1398
        %1400 = vdwg.mxu0
        %1401 = vmatprep.subr.bf16.mxu0 %v900
        %1402 = vmatpush1.bf16.msra.mxu0 %v899
        %1403 = vmatprep.subr.bf16.mxu0 %v916
        %1404 = vmatpush1.bf16.msra.mxu0 %v915
        %1405 = vmatprep.subr.bf16.mxu0 %v932
        %1406 = vmatpush1.bf16.msra.mxu0 %v931
        %1407 = vmatprep.subr.bf16.mxu0 %v948
        %1408 = vmatpush1.bf16.msra.mxu0 %v947
        %1409 = vmatprep.subr.bf16.mxu0 %v964
        %1410 = vmatpush1.bf16.msra.mxu0 %v963
        %1411 = vmatprep.subr.bf16.mxu0 %v980
        %1412 = vmatpush1.bf16.msra.mxu0 %v979
        %1413 = vmatprep.subr.bf16.mxu0 %v996
        %1414 = vmatpush1.bf16.msra.mxu0 %v995
        %1415 = vmatprep.subr.bf16.mxu0 %v1012
        %1416 = vmatpush1.bf16.msra.mxu0 %v1011
        %1417 = vmatprep.subr.bf16.mxu0 0
        %1418 = vmatpush1.bf16.msra.mxu0 0
        %1419 = vmatprep.subr.bf16.mxu0 0
        %1420 = vmatpush1.bf16.msra.mxu0 0
        %1421 = vmatprep.subr.bf16.mxu0 0
        %1422 = vmatpush1.bf16.msra.mxu0 0
        %1423 = vmatprep.subr.bf16.mxu0 0
        %1424 = vmatpush1.bf16.msra.mxu0 0
        %1425 = vmatprep.subr.bf16.mxu0 0
        %1426 = vmatpush1.bf16.msra.mxu0 0
        %1427 = vmatprep.subr.bf16.mxu0 0
        %1428 = vmatpush1.bf16.msra.mxu0 0
        %1429 = vmatprep.subr.bf16.mxu0 0
        %1430 = vmatpush1.bf16.msra.mxu0 0
        %1431 = vmatprep.subr.bf16.mxu0 0
        %1432 = vmatpush1.bf16.msra.mxu0 0
        %1433 = vmatprep.mubr.bf16.mxu0 0
        %1434 = vmatmul.mubr.bf16.gmra.mrb[0].mxu0 %v290
        %v1435 = vpop.f32.mrb[0].mxu0
        %v1436 = vadd.f32 %v474, %v1435
        %v1437 = vpop.f32.mrb[0].mxu0
        %v1438 = vadd.f32 %v478, %v1437
        %v1439 = vpop.f32.mrb[0].mxu0
        %v1440 = vadd.f32 %v474, %v1439
        %v1441 = vpop.f32.mrb[0].mxu0
        %v1442 = vadd.f32 %v478, %v1441
        %1443 = vdwg.mxu0
        %1444 = vmatprep.subr.bf16.mxu0 %v902
        %1445 = vmatpush1.bf16.msra.mxu0 %v901
        %1446 = vmatprep.subr.bf16.mxu0 %v918
        %1447 = vmatpush1.bf16.msra.mxu0 %v917
        %1448 = vmatprep.subr.bf16.mxu0 %v934
        %1449 = vmatpush1.bf16.msra.mxu0 %v933
        %1450 = vmatprep.subr.bf16.mxu0 %v950
        %1451 = vmatpush1.bf16.msra.mxu0 %v949
        %1452 = vmatprep.subr.bf16.mxu0 %v966
        %1453 = vmatpush1.bf16.msra.mxu0 %v965
        %1454 = vmatprep.subr.bf16.mxu0 %v982
        %1455 = vmatpush1.bf16.msra.mxu0 %v981
        %1456 = vmatprep.subr.bf16.mxu0 %v998
        %1457 = vmatpush1.bf16.msra.mxu0 %v997
        %1458 = vmatprep.subr.bf16.mxu0 %v1014
        %1459 = vmatpush1.bf16.msra.mxu0 %v1013
        %1460 = vmatprep.subr.bf16.mxu0 0
        %1461 = vmatpush1.bf16.msra.mxu0 0
        %1462 = vmatprep.subr.bf16.mxu0 0
        %1463 = vmatpush1.bf16.msra.mxu0 0
        %1464 = vmatprep.subr.bf16.mxu0 0
        %1465 = vmatpush1.bf16.msra.mxu0 0
        %1466 = vmatprep.subr.bf16.mxu0 0
        %1467 = vmatpush1.bf16.msra.mxu0 0
        %1468 = vmatprep.subr.bf16.mxu0 0
        %1469 = vmatpush1.bf16.msra.mxu0 0
        %1470 = vmatprep.subr.bf16.mxu0 0
        %1471 = vmatpush1.bf16.msra.mxu0 0
        %1472 = vmatprep.subr.bf16.mxu0 0
        %1473 = vmatpush1.bf16.msra.mxu0 0
        %1474 = vmatprep.subr.bf16.mxu0 0
        %1475 = vmatpush1.bf16.msra.mxu0 0
        %1476 = vmatprep.mubr.bf16.mxu0 0
        %1477 = vmatmul.mubr.bf16.gmra.mrb[0].mxu0 %v290
        %v1478 = vpop.f32.mrb[0].mxu0
        %v1479 = vadd.f32 %v482, %v1478
        %v1480 = vpop.f32.mrb[0].mxu0
        %v1481 = vadd.f32 %v486, %v1480
        %v1482 = vpop.f32.mrb[0].mxu0
        %v1483 = vadd.f32 %v482, %v1482
        %v1484 = vpop.f32.mrb[0].mxu0
        %v1485 = vadd.f32 %v486, %v1484
        %1486 = vdwg.mxu0
        %v1487 = vmax.f32 %v1178, 0.0
        %v1488 = vmax.f32 %v1180, 0.0
        %v1489 = vmax.f32 %v1221, 0.0
        %v1490 = vmax.f32 %v1223, 0.0
        %v1491 = vmax.f32 %v1264, 0.0
        %v1492 = vmax.f32 %v1266, 0.0
        %v1493 = vmax.f32 %v1307, 0.0
        %v1494 = vmax.f32 %v1309, 0.0
        %v1495 = vmax.f32 %v1350, 0.0
        %v1496 = vmax.f32 %v1352, 0.0
        %v1497 = vmax.f32 %v1393, 0.0
        %v1498 = vmax.f32 %v1395, 0.0
        %v1499 = vmax.f32 %v1436, 0.0
        %v1500 = vmax.f32 %v1438, 0.0
        %v1501 = vmax.f32 %v1479, 0.0
        %v1502 = vmax.f32 %v1481, 0.0
        %v1503 = vmax.f32 %v1182, 0.0
        %v1504 = vmax.f32 %v1184, 0.0
        %v1505 = vmax.f32 %v1225, 0.0
        %v1506 = vmax.f32 %v1227, 0.0
        %v1507 = vmax.f32 %v1268, 0.0
        %v1508 = vmax.f32 %v1270, 0.0
        %v1509 = vmax.f32 %v1311, 0.0
        %v1510 = vmax.f32 %v1313, 0.0
        %v1511 = vmax.f32 %v1354, 0.0
        %v1512 = vmax.f32 %v1356, 0.0
        %v1513 = vmax.f32 %v1397, 0.0
        %v1514 = vmax.f32 %v1399, 0.0
        %v1515 = vmax.f32 %v1440, 0.0
        %v1516 = vmax.f32 %v1442, 0.0
        %v1517 = vmax.f32 %v1483, 0.0
        %v1518 = vmax.f32 %v1485, 0.0
        %v1519 = vpack.c.bf16 %v1503, %v1487
        %v1520 = vpack.c.bf16 %v1504, %v1488
        %v1521 = vpack.c.bf16 %v1505, %v1489
        %v1522 = vpack.c.bf16 %v1506, %v1490
        %v1523 = vpack.c.bf16 %v1507, %v1491
        %v1524 = vpack.c.bf16 %v1508, %v1492
        %v1525 = vpack.c.bf16 %v1509, %v1493
        %v1526 = vpack.c.bf16 %v1510, %v1494
        %v1527 = vpack.c.bf16 %v1511, %v1495
        %v1528 = vpack.c.bf16 %v1512, %v1496
        %v1529 = vpack.c.bf16 %v1513, %v1497
        %v1530 = vpack.c.bf16 %v1514, %v1498
        %v1531 = vpack.c.bf16 %v1515, %v1499
        %v1532 = vpack.c.bf16 %v1516, %v1500
        %v1533 = vpack.c.bf16 %v1517, %v1501
        %v1534 = vpack.c.bf16 %v1518, %v1502
        %v1535 = vld [vmem:[#allocation8] sm:$0xf]
        %v1536 = vld [vmem:[#allocation8 + $0x4] sm:$0xf]
        %v1537 = vld [vmem:[#allocation8 + $0x8] sm:$0xf]
        %v1538 = vld [vmem:[#allocation8 + $0xc] sm:$0xf]
        %v1539 = vld [vmem:[#allocation8 + $0x10] sm:$0xf]
        %v1540 = vld [vmem:[#allocation8 + $0x14] sm:$0xf]
        %v1541 = vld [vmem:[#allocation8 + $0x18] sm:$0xf]
        %v1542 = vld [vmem:[#allocation8 + $0x1c] sm:$0xf]
        %v1543 = vld [vmem:[#allocation8 + $0x20] sm:$0xf]
        %v1544 = vld [vmem:[#allocation8 + $0x24] sm:$0xf]
        %v1545 = vld [vmem:[#allocation8 + $0x28] sm:$0xf]
        %v1546 = vld [vmem:[#allocation8 + $0x2c] sm:$0xf]
        %v1547 = vld [vmem:[#allocation8 + $0x30] sm:$0xf]
        %v1548 = vld [vmem:[#allocation8 + $0x34] sm:$0xf]
        %v1549 = vld [vmem:[#allocation8 + $0x38] sm:$0xf]
        %v1550 = vld [vmem:[#allocation8 + $0x3c] sm:$0xf]
        %v1551 = vld [vmem:[#allocation8 + $0x40] sm:$0xf]
        %v1552 = vld [vmem:[#allocation8 + $0x44] sm:$0xf]
        %v1553 = vld [vmem:[#allocation8 + $0x48] sm:$0xf]
        %v1554 = vld [vmem:[#allocation8 + $0x4c] sm:$0xf]
        %v1555 = vld [vmem:[#allocation8 + $0x50] sm:$0xf]
        %v1556 = vld [vmem:[#allocation8 + $0x54] sm:$0xf]
        %v1557 = vld [vmem:[#allocation8 + $0x58] sm:$0xf]
        %v1558 = vld [vmem:[#allocation8 + $0x5c] sm:$0xf]
        %v1559 = vld [vmem:[#allocation8 + $0x60] sm:$0xf]
        %v1560 = vld [vmem:[#allocation8 + $0x64] sm:$0xf]
        %v1561 = vld [vmem:[#allocation8 + $0x68] sm:$0xf]
        %v1562 = vld [vmem:[#allocation8 + $0x6c] sm:$0xf]
        %v1563 = vld [vmem:[#allocation8 + $0x70] sm:$0xf]
        %v1564 = vld [vmem:[#allocation8 + $0x74] sm:$0xf]
        %v1565 = vld [vmem:[#allocation8 + $0x78] sm:$0xf]
        %v1566 = vld [vmem:[#allocation8 + $0x7c] sm:$0xf]
        %v1567 = vld [vmem:[#allocation8 + $0x80] sm:$0xf]
        %v1568 = vld [vmem:[#allocation8 + $0x84] sm:$0xf]
        %v1569 = vld [vmem:[#allocation8 + $0x88] sm:$0xf]
        %v1570 = vld [vmem:[#allocation8 + $0x8c] sm:$0xf]
        %v1571 = vld [vmem:[#allocation8 + $0x90] sm:$0xf]
        %v1572 = vld [vmem:[#allocation8 + $0x94] sm:$0xf]
        %v1573 = vld [vmem:[#allocation8 + $0x98] sm:$0xf]
        %v1574 = vld [vmem:[#allocation8 + $0x9c] sm:$0xf]
        %v1575 = vld [vmem:[#allocation8 + $0xa0] sm:$0xf]
        %v1576 = vld [vmem:[#allocation8 + $0xa4] sm:$0xf]
        %v1577 = vld [vmem:[#allocation8 + $0xa8] sm:$0xf]
        %v1578 = vld [vmem:[#allocation8 + $0xac] sm:$0xf]
        %v1579 = vld [vmem:[#allocation8 + $0xb0] sm:$0xf]
        %v1580 = vld [vmem:[#allocation8 + $0xb4] sm:$0xf]
        %v1581 = vld [vmem:[#allocation8 + $0xb8] sm:$0xf]
        %v1582 = vld [vmem:[#allocation8 + $0xbc] sm:$0xf]
        %v1583 = vld [vmem:[#allocation8 + $0xc0] sm:$0xf]
        %v1584 = vld [vmem:[#allocation8 + $0xc4] sm:$0xf]
        %v1585 = vld [vmem:[#allocation8 + $0xc8] sm:$0xf]
        %v1586 = vld [vmem:[#allocation8 + $0xcc] sm:$0xf]
        %v1587 = vld [vmem:[#allocation8 + $0xd0] sm:$0xf]
        %v1588 = vld [vmem:[#allocation8 + $0xd4] sm:$0xf]
        %v1589 = vld [vmem:[#allocation8 + $0xd8] sm:$0xf]
        %v1590 = vld [vmem:[#allocation8 + $0xdc] sm:$0xf]
        %v1591 = vld [vmem:[#allocation8 + $0xe0] sm:$0xf]
        %v1592 = vld [vmem:[#allocation8 + $0xe4] sm:$0xf]
        %v1593 = vld [vmem:[#allocation8 + $0xe8] sm:$0xf]
        %v1594 = vld [vmem:[#allocation8 + $0xec] sm:$0xf]
        %v1595 = vld [vmem:[#allocation8 + $0xf0] sm:$0xf]
        %v1596 = vld [vmem:[#allocation8 + $0xf4] sm:$0xf]
        %v1597 = vld [vmem:[#allocation8 + $0xf8] sm:$0xf]
        %v1598 = vld [vmem:[#allocation8 + $0xfc] sm:$0xf]
        %v1599 = vld [vmem:[#allocation8 + $0x100] sm:$0xf]
        %v1600 = vld [vmem:[#allocation8 + $0x104] sm:$0xf]
        %v1601 = vld [vmem:[#allocation8 + $0x108] sm:$0xf]
        %v1602 = vld [vmem:[#allocation8 + $0x10c] sm:$0xf]
        %v1603 = vld [vmem:[#allocation8 + $0x110] sm:$0xf]
        %v1604 = vld [vmem:[#allocation8 + $0x114] sm:$0xf]
        %v1605 = vld [vmem:[#allocation8 + $0x118] sm:$0xf]
        %v1606 = vld [vmem:[#allocation8 + $0x11c] sm:$0xf]
        %v1607 = vld [vmem:[#allocation8 + $0x120] sm:$0xf]
        %v1608 = vld [vmem:[#allocation8 + $0x124] sm:$0xf]
        %v1609 = vld [vmem:[#allocation8 + $0x128] sm:$0xf]
        %v1610 = vld [vmem:[#allocation8 + $0x12c] sm:$0xf]
        %v1611 = vld [vmem:[#allocation8 + $0x130] sm:$0xf]
        %v1612 = vld [vmem:[#allocation8 + $0x134] sm:$0xf]
        %v1613 = vld [vmem:[#allocation8 + $0x138] sm:$0xf]
        %v1614 = vld [vmem:[#allocation8 + $0x13c] sm:$0xf]
        %v1615 = vld [vmem:[#allocation8 + $0x140] sm:$0xf]
        %v1616 = vld [vmem:[#allocation8 + $0x144] sm:$0xf]
        %v1617 = vld [vmem:[#allocation8 + $0x148] sm:$0xf]
        %v1618 = vld [vmem:[#allocation8 + $0x14c] sm:$0xf]
        %v1619 = vld [vmem:[#allocation8 + $0x150] sm:$0xf]
        %v1620 = vld [vmem:[#allocation8 + $0x154] sm:$0xf]
        %v1621 = vld [vmem:[#allocation8 + $0x158] sm:$0xf]
        %v1622 = vld [vmem:[#allocation8 + $0x15c] sm:$0xf]
        %v1623 = vld [vmem:[#allocation8 + $0x160] sm:$0xf]
        %v1624 = vld [vmem:[#allocation8 + $0x164] sm:$0xf]
        %v1625 = vld [vmem:[#allocation8 + $0x168] sm:$0xf]
        %v1626 = vld [vmem:[#allocation8 + $0x16c] sm:$0xf]
        %v1627 = vld [vmem:[#allocation8 + $0x170] sm:$0xf]
        %v1628 = vld [vmem:[#allocation8 + $0x174] sm:$0xf]
        %v1629 = vld [vmem:[#allocation8 + $0x178] sm:$0xf]
        %v1630 = vld [vmem:[#allocation8 + $0x17c] sm:$0xf]
        %v1631 = vld [vmem:[#allocation8 + $0x180] sm:$0xf]
        %v1632 = vld [vmem:[#allocation8 + $0x184] sm:$0xf]
        %v1633 = vld [vmem:[#allocation8 + $0x188] sm:$0xf]
        %v1634 = vld [vmem:[#allocation8 + $0x18c] sm:$0xf]
        %v1635 = vld [vmem:[#allocation8 + $0x190] sm:$0xf]
        %v1636 = vld [vmem:[#allocation8 + $0x194] sm:$0xf]
        %v1637 = vld [vmem:[#allocation8 + $0x198] sm:$0xf]
        %v1638 = vld [vmem:[#allocation8 + $0x19c] sm:$0xf]
        %v1639 = vld [vmem:[#allocation8 + $0x1a0] sm:$0xf]
        %v1640 = vld [vmem:[#allocation8 + $0x1a4] sm:$0xf]
        %v1641 = vld [vmem:[#allocation8 + $0x1a8] sm:$0xf]
        %v1642 = vld [vmem:[#allocation8 + $0x1ac] sm:$0xf]
        %v1643 = vld [vmem:[#allocation8 + $0x1b0] sm:$0xf]
        %v1644 = vld [vmem:[#allocation8 + $0x1b4] sm:$0xf]
        %v1645 = vld [vmem:[#allocation8 + $0x1b8] sm:$0xf]
        %v1646 = vld [vmem:[#allocation8 + $0x1bc] sm:$0xf]
        %v1647 = vld [vmem:[#allocation8 + $0x1c0] sm:$0xf]
        %v1648 = vld [vmem:[#allocation8 + $0x1c4] sm:$0xf]
        %v1649 = vld [vmem:[#allocation8 + $0x1c8] sm:$0xf]
        %v1650 = vld [vmem:[#allocation8 + $0x1cc] sm:$0xf]
        %v1651 = vld [vmem:[#allocation8 + $0x1d0] sm:$0xf]
        %v1652 = vld [vmem:[#allocation8 + $0x1d4] sm:$0xf]
        %v1653 = vld [vmem:[#allocation8 + $0x1d8] sm:$0xf]
        %v1654 = vld [vmem:[#allocation8 + $0x1dc] sm:$0xf]
        %v1655 = vld [vmem:[#allocation8 + $0x1e0] sm:$0xf]
        %v1656 = vld [vmem:[#allocation8 + $0x1e4] sm:$0xf]
        %v1657 = vld [vmem:[#allocation8 + $0x1e8] sm:$0xf]
        %v1658 = vld [vmem:[#allocation8 + $0x1ec] sm:$0xf]
        %v1659 = vld [vmem:[#allocation8 + $0x1f0] sm:$0xf]
        %v1660 = vld [vmem:[#allocation8 + $0x1f4] sm:$0xf]
        %v1661 = vld [vmem:[#allocation8 + $0x1f8] sm:$0xf]
        %v1662 = vld [vmem:[#allocation8 + $0x1fc] sm:$0xf]
        %v1663 = vld [vmem:[#allocation8 + $0x200] sm:$0xf]
        %v1664 = vld [vmem:[#allocation8 + $0x204] sm:$0xf]
        %v1665 = vld [vmem:[#allocation8 + $0x208] sm:$0xf]
        %v1666 = vld [vmem:[#allocation8 + $0x20c] sm:$0xf]
        %v1667 = vld [vmem:[#allocation8 + $0x210] sm:$0xf]
        %v1668 = vld [vmem:[#allocation8 + $0x214] sm:$0xf]
        %v1669 = vld [vmem:[#allocation8 + $0x218] sm:$0xf]
        %v1670 = vld [vmem:[#allocation8 + $0x21c] sm:$0xf]
        %v1671 = vld [vmem:[#allocation8 + $0x220] sm:$0xf]
        %v1672 = vld [vmem:[#allocation8 + $0x224] sm:$0xf]
        %v1673 = vld [vmem:[#allocation8 + $0x228] sm:$0xf]
        %v1674 = vld [vmem:[#allocation8 + $0x22c] sm:$0xf]
        %v1675 = vld [vmem:[#allocation8 + $0x230] sm:$0xf]
        %v1676 = vld [vmem:[#allocation8 + $0x234] sm:$0xf]
        %v1677 = vld [vmem:[#allocation8 + $0x238] sm:$0xf]
        %v1678 = vld [vmem:[#allocation8 + $0x23c] sm:$0xf]
        %v1679 = vld [vmem:[#allocation8 + $0x240] sm:$0xf]
        %v1680 = vld [vmem:[#allocation8 + $0x244] sm:$0xf]
        %v1681 = vld [vmem:[#allocation8 + $0x248] sm:$0xf]
        %v1682 = vld [vmem:[#allocation8 + $0x24c] sm:$0xf]
        %v1683 = vld [vmem:[#allocation8 + $0x250] sm:$0xf]
        %v1684 = vld [vmem:[#allocation8 + $0x254] sm:$0xf]
        %v1685 = vld [vmem:[#allocation8 + $0x258] sm:$0xf]
        %v1686 = vld [vmem:[#allocation8 + $0x25c] sm:$0xf]
        %v1687 = vld [vmem:[#allocation8 + $0x260] sm:$0xf]
        %v1688 = vld [vmem:[#allocation8 + $0x264] sm:$0xf]
        %v1689 = vld [vmem:[#allocation8 + $0x268] sm:$0xf]
        %v1690 = vld [vmem:[#allocation8 + $0x26c] sm:$0xf]
        %v1691 = vld [vmem:[#allocation8 + $0x270] sm:$0xf]
        %v1692 = vld [vmem:[#allocation8 + $0x274] sm:$0xf]
        %v1693 = vld [vmem:[#allocation8 + $0x278] sm:$0xf]
        %v1694 = vld [vmem:[#allocation8 + $0x27c] sm:$0xf]
        %v1695 = vld [vmem:[#allocation8 + $0x280] sm:$0xf]
        %v1696 = vld [vmem:[#allocation8 + $0x284] sm:$0xf]
        %v1697 = vld [vmem:[#allocation8 + $0x288] sm:$0xf]
        %v1698 = vld [vmem:[#allocation8 + $0x28c] sm:$0xf]
        %v1699 = vld [vmem:[#allocation8 + $0x290] sm:$0xf]
        %v1700 = vld [vmem:[#allocation8 + $0x294] sm:$0xf]
        %v1701 = vld [vmem:[#allocation8 + $0x298] sm:$0xf]
        %v1702 = vld [vmem:[#allocation8 + $0x29c] sm:$0xf]
        %v1703 = vld [vmem:[#allocation8 + $0x2a0] sm:$0xf]
        %v1704 = vld [vmem:[#allocation8 + $0x2a4] sm:$0xf]
        %v1705 = vld [vmem:[#allocation8 + $0x2a8] sm:$0xf]
        %v1706 = vld [vmem:[#allocation8 + $0x2ac] sm:$0xf]
        %v1707 = vld [vmem:[#allocation8 + $0x2b0] sm:$0xf]
        %v1708 = vld [vmem:[#allocation8 + $0x2b4] sm:$0xf]
        %v1709 = vld [vmem:[#allocation8 + $0x2b8] sm:$0xf]
        %v1710 = vld [vmem:[#allocation8 + $0x2bc] sm:$0xf]
        %v1711 = vld [vmem:[#allocation8 + $0x2c0] sm:$0xf]
        %v1712 = vld [vmem:[#allocation8 + $0x2c4] sm:$0xf]
        %v1713 = vld [vmem:[#allocation8 + $0x2c8] sm:$0xf]
        %v1714 = vld [vmem:[#allocation8 + $0x2cc] sm:$0xf]
        %v1715 = vld [vmem:[#allocation8 + $0x2d0] sm:$0xf]
        %v1716 = vld [vmem:[#allocation8 + $0x2d4] sm:$0xf]
        %v1717 = vld [vmem:[#allocation8 + $0x2d8] sm:$0xf]
        %v1718 = vld [vmem:[#allocation8 + $0x2dc] sm:$0xf]
        %v1719 = vld [vmem:[#allocation8 + $0x2e0] sm:$0xf]
        %v1720 = vld [vmem:[#allocation8 + $0x2e4] sm:$0xf]
        %v1721 = vld [vmem:[#allocation8 + $0x2e8] sm:$0xf]
        %v1722 = vld [vmem:[#allocation8 + $0x2ec] sm:$0xf]
        %v1723 = vld [vmem:[#allocation8 + $0x2f0] sm:$0xf]
        %v1724 = vld [vmem:[#allocation8 + $0x2f4] sm:$0xf]
        %v1725 = vld [vmem:[#allocation8 + $0x2f8] sm:$0xf]
        %v1726 = vld [vmem:[#allocation8 + $0x2fc] sm:$0xf]
        %v1727 = vld [vmem:[#allocation8 + $0x300] sm:$0xf]
        %v1728 = vld [vmem:[#allocation8 + $0x304] sm:$0xf]
        %v1729 = vld [vmem:[#allocation8 + $0x308] sm:$0xf]
        %v1730 = vld [vmem:[#allocation8 + $0x30c] sm:$0xf]
        %v1731 = vld [vmem:[#allocation8 + $0x310] sm:$0xf]
        %v1732 = vld [vmem:[#allocation8 + $0x314] sm:$0xf]
        %v1733 = vld [vmem:[#allocation8 + $0x318] sm:$0xf]
        %v1734 = vld [vmem:[#allocation8 + $0x31c] sm:$0xf]
        %v1735 = vld [vmem:[#allocation8 + $0x320] sm:$0xf]
        %v1736 = vld [vmem:[#allocation8 + $0x324] sm:$0xf]
        %v1737 = vld [vmem:[#allocation8 + $0x328] sm:$0xf]
        %v1738 = vld [vmem:[#allocation8 + $0x32c] sm:$0xf]
        %v1739 = vld [vmem:[#allocation8 + $0x330] sm:$0xf]
        %v1740 = vld [vmem:[#allocation8 + $0x334] sm:$0xf]
        %v1741 = vld [vmem:[#allocation8 + $0x338] sm:$0xf]
        %v1742 = vld [vmem:[#allocation8 + $0x33c] sm:$0xf]
        %v1743 = vld [vmem:[#allocation8 + $0x340] sm:$0xf]
        %v1744 = vld [vmem:[#allocation8 + $0x344] sm:$0xf]
        %v1745 = vld [vmem:[#allocation8 + $0x348] sm:$0xf]
        %v1746 = vld [vmem:[#allocation8 + $0x34c] sm:$0xf]
        %v1747 = vld [vmem:[#allocation8 + $0x350] sm:$0xf]
        %v1748 = vld [vmem:[#allocation8 + $0x354] sm:$0xf]
        %v1749 = vld [vmem:[#allocation8 + $0x358] sm:$0xf]
        %v1750 = vld [vmem:[#allocation8 + $0x35c] sm:$0xf]
        %v1751 = vld [vmem:[#allocation8 + $0x360] sm:$0xf]
        %v1752 = vld [vmem:[#allocation8 + $0x364] sm:$0xf]
        %v1753 = vld [vmem:[#allocation8 + $0x368] sm:$0xf]
        %v1754 = vld [vmem:[#allocation8 + $0x36c] sm:$0xf]
        %v1755 = vld [vmem:[#allocation8 + $0x370] sm:$0xf]
        %v1756 = vld [vmem:[#allocation8 + $0x374] sm:$0xf]
        %v1757 = vld [vmem:[#allocation8 + $0x378] sm:$0xf]
        %v1758 = vld [vmem:[#allocation8 + $0x37c] sm:$0xf]
        %v1759 = vld [vmem:[#allocation8 + $0x380] sm:$0xf]
        %v1760 = vld [vmem:[#allocation8 + $0x384] sm:$0xf]
        %v1761 = vld [vmem:[#allocation8 + $0x388] sm:$0xf]
        %v1762 = vld [vmem:[#allocation8 + $0x38c] sm:$0xf]
        %v1763 = vld [vmem:[#allocation8 + $0x390] sm:$0xf]
        %v1764 = vld [vmem:[#allocation8 + $0x394] sm:$0xf]
        %v1765 = vld [vmem:[#allocation8 + $0x398] sm:$0xf]
        %v1766 = vld [vmem:[#allocation8 + $0x39c] sm:$0xf]
        %v1767 = vld [vmem:[#allocation8 + $0x3a0] sm:$0xf]
        %v1768 = vld [vmem:[#allocation8 + $0x3a4] sm:$0xf]
        %v1769 = vld [vmem:[#allocation8 + $0x3a8] sm:$0xf]
        %v1770 = vld [vmem:[#allocation8 + $0x3ac] sm:$0xf]
        %v1771 = vld [vmem:[#allocation8 + $0x3b0] sm:$0xf]
        %v1772 = vld [vmem:[#allocation8 + $0x3b4] sm:$0xf]
        %v1773 = vld [vmem:[#allocation8 + $0x3b8] sm:$0xf]
        %v1774 = vld [vmem:[#allocation8 + $0x3bc] sm:$0xf]
        %v1775 = vld [vmem:[#allocation8 + $0x3c0] sm:$0xf]
        %v1776 = vld [vmem:[#allocation8 + $0x3c4] sm:$0xf]
        %v1777 = vld [vmem:[#allocation8 + $0x3c8] sm:$0xf]
        %v1778 = vld [vmem:[#allocation8 + $0x3cc] sm:$0xf]
        %v1779 = vld [vmem:[#allocation8 + $0x3d0] sm:$0xf]
        %v1780 = vld [vmem:[#allocation8 + $0x3d4] sm:$0xf]
        %v1781 = vld [vmem:[#allocation8 + $0x3d8] sm:$0xf]
        %v1782 = vld [vmem:[#allocation8 + $0x3dc] sm:$0xf]
        %v1783 = vld [vmem:[#allocation8 + $0x3e0] sm:$0xf]
        %v1784 = vld [vmem:[#allocation8 + $0x3e4] sm:$0xf]
        %v1785 = vld [vmem:[#allocation8 + $0x3e8] sm:$0xf]
        %v1786 = vld [vmem:[#allocation8 + $0x3ec] sm:$0xf]
        %v1787 = vld [vmem:[#allocation8 + $0x3f0] sm:$0xf]
        %v1788 = vld [vmem:[#allocation8 + $0x3f4] sm:$0xf]
        %v1789 = vld [vmem:[#allocation8 + $0x3f8] sm:$0xf]
        %v1790 = vld [vmem:[#allocation8 + $0x3fc] sm:$0xf]
        %v1791 = vld [vmem:[%s4] sm:$0x1]
        %v1793 = vlaneseq
        %v1794 = vshrl.u32 %v1793, 7
        %v1795 = vsub.s32 0, %v1794
        %v1796 = vrot.slane %v1791, %v1795
        %v2054 = vunpack.c.l.b16 %v1535
        %v2055 = vunpack.c.l.b16 %v1536
        %v2056 = vunpack.c.l.b16 %v1537
        %v2057 = vunpack.c.l.b16 %v1538
        %v2058 = vunpack.c.l.b16 %v1539
        %v2059 = vunpack.c.l.b16 %v1540
        %v2060 = vunpack.c.l.b16 %v1541
        %v2061 = vunpack.c.l.b16 %v1542
        %v2062 = vunpack.c.l.b16 %v1543
        %v2063 = vunpack.c.l.b16 %v1544
        %v2064 = vunpack.c.l.b16 %v1545
        %v2065 = vunpack.c.l.b16 %v1546
        %v2066 = vunpack.c.l.b16 %v1547
        %v2067 = vunpack.c.l.b16 %v1548
        %v2068 = vunpack.c.l.b16 %v1549
        %v2069 = vunpack.c.l.b16 %v1550
        %v2070 = vunpack.c.l.b16 %v1551
        %v2071 = vunpack.c.l.b16 %v1552
        %v2072 = vunpack.c.l.b16 %v1553
        %v2073 = vunpack.c.l.b16 %v1554
        %v2074 = vunpack.c.l.b16 %v1555
        %v2075 = vunpack.c.l.b16 %v1556
        %v2076 = vunpack.c.l.b16 %v1557
        %v2077 = vunpack.c.l.b16 %v1558
        %v2078 = vunpack.c.l.b16 %v1559
        %v2079 = vunpack.c.l.b16 %v1560
        %v2080 = vunpack.c.l.b16 %v1561
        %v2081 = vunpack.c.l.b16 %v1562
        %v2082 = vunpack.c.l.b16 %v1563
        %v2083 = vunpack.c.l.b16 %v1564
        %v2084 = vunpack.c.l.b16 %v1565
        %v2085 = vunpack.c.l.b16 %v1566
        %v2086 = vunpack.c.l.b16 %v1567
        %v2087 = vunpack.c.l.b16 %v1568
        %v2088 = vunpack.c.l.b16 %v1569
        %v2089 = vunpack.c.l.b16 %v1570
        %v2090 = vunpack.c.l.b16 %v1571
        %v2091 = vunpack.c.l.b16 %v1572
        %v2092 = vunpack.c.l.b16 %v1573
        %v2093 = vunpack.c.l.b16 %v1574
        %v2094 = vunpack.c.l.b16 %v1575
        %v2095 = vunpack.c.l.b16 %v1576
        %v2096 = vunpack.c.l.b16 %v1577
        %v2097 = vunpack.c.l.b16 %v1578
        %v2098 = vunpack.c.l.b16 %v1579
        %v2099 = vunpack.c.l.b16 %v1580
        %v2100 = vunpack.c.l.b16 %v1581
        %v2101 = vunpack.c.l.b16 %v1582
        %v2102 = vunpack.c.l.b16 %v1583
        %v2103 = vunpack.c.l.b16 %v1584
        %v2104 = vunpack.c.l.b16 %v1585
        %v2105 = vunpack.c.l.b16 %v1586
        %v2106 = vunpack.c.l.b16 %v1587
        %v2107 = vunpack.c.l.b16 %v1588
        %v2108 = vunpack.c.l.b16 %v1589
        %v2109 = vunpack.c.l.b16 %v1590
        %v2110 = vunpack.c.l.b16 %v1591
        %v2111 = vunpack.c.l.b16 %v1592
        %v2112 = vunpack.c.l.b16 %v1593
        %v2113 = vunpack.c.l.b16 %v1594
        %v2114 = vunpack.c.l.b16 %v1595
        %v2115 = vunpack.c.l.b16 %v1596
        %v2116 = vunpack.c.l.b16 %v1597
        %v2117 = vunpack.c.l.b16 %v1598
        %v2118 = vunpack.c.l.b16 %v1599
        %v2119 = vunpack.c.l.b16 %v1600
        %v2120 = vunpack.c.l.b16 %v1601
        %v2121 = vunpack.c.l.b16 %v1602
        %v2122 = vunpack.c.l.b16 %v1603
        %v2123 = vunpack.c.l.b16 %v1604
        %v2124 = vunpack.c.l.b16 %v1605
        %v2125 = vunpack.c.l.b16 %v1606
        %v2126 = vunpack.c.l.b16 %v1607
        %v2127 = vunpack.c.l.b16 %v1608
        %v2128 = vunpack.c.l.b16 %v1609
        %v2129 = vunpack.c.l.b16 %v1610
        %v2130 = vunpack.c.l.b16 %v1611
        %v2131 = vunpack.c.l.b16 %v1612
        %v2132 = vunpack.c.l.b16 %v1613
        %v2133 = vunpack.c.l.b16 %v1614
        %v2134 = vunpack.c.l.b16 %v1615
        %v2135 = vunpack.c.l.b16 %v1616
        %v2136 = vunpack.c.l.b16 %v1617
        %v2137 = vunpack.c.l.b16 %v1618
        %v2138 = vunpack.c.l.b16 %v1619
        %v2139 = vunpack.c.l.b16 %v1620
        %v2140 = vunpack.c.l.b16 %v1621
        %v2141 = vunpack.c.l.b16 %v1622
        %v2142 = vunpack.c.l.b16 %v1623
        %v2143 = vunpack.c.l.b16 %v1624
        %v2144 = vunpack.c.l.b16 %v1625
        %v2145 = vunpack.c.l.b16 %v1626
        %v2146 = vunpack.c.l.b16 %v1627
        %v2147 = vunpack.c.l.b16 %v1628
        %v2148 = vunpack.c.l.b16 %v1629
        %v2149 = vunpack.c.l.b16 %v1630
        %v2150 = vunpack.c.l.b16 %v1631
        %v2151 = vunpack.c.l.b16 %v1632
        %v2152 = vunpack.c.l.b16 %v1633
        %v2153 = vunpack.c.l.b16 %v1634
        %v2154 = vunpack.c.l.b16 %v1635
        %v2155 = vunpack.c.l.b16 %v1636
        %v2156 = vunpack.c.l.b16 %v1637
        %v2157 = vunpack.c.l.b16 %v1638
        %v2158 = vunpack.c.l.b16 %v1639
        %v2159 = vunpack.c.l.b16 %v1640
        %v2160 = vunpack.c.l.b16 %v1641
        %v2161 = vunpack.c.l.b16 %v1642
        %v2162 = vunpack.c.l.b16 %v1643
        %v2163 = vunpack.c.l.b16 %v1644
        %v2164 = vunpack.c.l.b16 %v1645
        %v2165 = vunpack.c.l.b16 %v1646
        %v2166 = vunpack.c.l.b16 %v1647
        %v2167 = vunpack.c.l.b16 %v1648
        %v2168 = vunpack.c.l.b16 %v1649
        %v2169 = vunpack.c.l.b16 %v1650
        %v2170 = vunpack.c.l.b16 %v1651
        %v2171 = vunpack.c.l.b16 %v1652
        %v2172 = vunpack.c.l.b16 %v1653
        %v2173 = vunpack.c.l.b16 %v1654
        %v2174 = vunpack.c.l.b16 %v1655
        %v2175 = vunpack.c.l.b16 %v1656
        %v2176 = vunpack.c.l.b16 %v1657
        %v2177 = vunpack.c.l.b16 %v1658
        %v2178 = vunpack.c.l.b16 %v1659
        %v2179 = vunpack.c.l.b16 %v1660
        %v2180 = vunpack.c.l.b16 %v1661
        %v2181 = vunpack.c.l.b16 %v1662
        %v2182 = vunpack.c.l.b16 %v1663
        %v2183 = vunpack.c.l.b16 %v1664
        %v2184 = vunpack.c.l.b16 %v1665
        %v2185 = vunpack.c.l.b16 %v1666
        %v2186 = vunpack.c.l.b16 %v1667
        %v2187 = vunpack.c.l.b16 %v1668
        %v2188 = vunpack.c.l.b16 %v1669
        %v2189 = vunpack.c.l.b16 %v1670
        %v2190 = vunpack.c.l.b16 %v1671
        %v2191 = vunpack.c.l.b16 %v1672
        %v2192 = vunpack.c.l.b16 %v1673
        %v2193 = vunpack.c.l.b16 %v1674
        %v2194 = vunpack.c.l.b16 %v1675
        %v2195 = vunpack.c.l.b16 %v1676
        %v2196 = vunpack.c.l.b16 %v1677
        %v2197 = vunpack.c.l.b16 %v1678
        %v2198 = vunpack.c.l.b16 %v1679
        %v2199 = vunpack.c.l.b16 %v1680
        %v2200 = vunpack.c.l.b16 %v1681
        %v2201 = vunpack.c.l.b16 %v1682
        %v2202 = vunpack.c.l.b16 %v1683
        %v2203 = vunpack.c.l.b16 %v1684
        %v2204 = vunpack.c.l.b16 %v1685
        %v2205 = vunpack.c.l.b16 %v1686
        %v2206 = vunpack.c.l.b16 %v1687
        %v2207 = vunpack.c.l.b16 %v1688
        %v2208 = vunpack.c.l.b16 %v1689
        %v2209 = vunpack.c.l.b16 %v1690
        %v2210 = vunpack.c.l.b16 %v1691
        %v2211 = vunpack.c.l.b16 %v1692
        %v2212 = vunpack.c.l.b16 %v1693
        %v2213 = vunpack.c.l.b16 %v1694
        %v2214 = vunpack.c.l.b16 %v1695
        %v2215 = vunpack.c.l.b16 %v1696
        %v2216 = vunpack.c.l.b16 %v1697
        %v2217 = vunpack.c.l.b16 %v1698
        %v2218 = vunpack.c.l.b16 %v1699
        %v2219 = vunpack.c.l.b16 %v1700
        %v2220 = vunpack.c.l.b16 %v1701
        %v2221 = vunpack.c.l.b16 %v1702
        %v2222 = vunpack.c.l.b16 %v1703
        %v2223 = vunpack.c.l.b16 %v1704
        %v2224 = vunpack.c.l.b16 %v1705
        %v2225 = vunpack.c.l.b16 %v1706
        %v2226 = vunpack.c.l.b16 %v1707
        %v2227 = vunpack.c.l.b16 %v1708
        %v2228 = vunpack.c.l.b16 %v1709
        %v2229 = vunpack.c.l.b16 %v1710
        %v2230 = vunpack.c.l.b16 %v1711
        %v2231 = vunpack.c.l.b16 %v1712
        %v2232 = vunpack.c.l.b16 %v1713
        %v2233 = vunpack.c.l.b16 %v1714
        %v2234 = vunpack.c.l.b16 %v1715
        %v2235 = vunpack.c.l.b16 %v1716
        %v2236 = vunpack.c.l.b16 %v1717
        %v2237 = vunpack.c.l.b16 %v1718
        %v2238 = vunpack.c.l.b16 %v1719
        %v2239 = vunpack.c.l.b16 %v1720
        %v2240 = vunpack.c.l.b16 %v1721
        %v2241 = vunpack.c.l.b16 %v1722
        %v2242 = vunpack.c.l.b16 %v1723
        %v2243 = vunpack.c.l.b16 %v1724
        %v2244 = vunpack.c.l.b16 %v1725
        %v2245 = vunpack.c.l.b16 %v1726
        %v2246 = vunpack.c.l.b16 %v1727
        %v2247 = vunpack.c.l.b16 %v1728
        %v2248 = vunpack.c.l.b16 %v1729
        %v2249 = vunpack.c.l.b16 %v1730
        %v2250 = vunpack.c.l.b16 %v1731
        %v2251 = vunpack.c.l.b16 %v1732
        %v2252 = vunpack.c.l.b16 %v1733
        %v2253 = vunpack.c.l.b16 %v1734
        %v2254 = vunpack.c.l.b16 %v1735
        %v2255 = vunpack.c.l.b16 %v1736
        %v2256 = vunpack.c.l.b16 %v1737
        %v2257 = vunpack.c.l.b16 %v1738
        %v2258 = vunpack.c.l.b16 %v1739
        %v2259 = vunpack.c.l.b16 %v1740
        %v2260 = vunpack.c.l.b16 %v1741
        %v2261 = vunpack.c.l.b16 %v1742
        %v2262 = vunpack.c.l.b16 %v1743
        %v2263 = vunpack.c.l.b16 %v1744
        %v2264 = vunpack.c.l.b16 %v1745
        %v2265 = vunpack.c.l.b16 %v1746
        %v2266 = vunpack.c.l.b16 %v1747
        %v2267 = vunpack.c.l.b16 %v1748
        %v2268 = vunpack.c.l.b16 %v1749
        %v2269 = vunpack.c.l.b16 %v1750
        %v2270 = vunpack.c.l.b16 %v1751
        %v2271 = vunpack.c.l.b16 %v1752
        %v2272 = vunpack.c.l.b16 %v1753
        %v2273 = vunpack.c.l.b16 %v1754
        %v2274 = vunpack.c.l.b16 %v1755
        %v2275 = vunpack.c.l.b16 %v1756
        %v2276 = vunpack.c.l.b16 %v1757
        %v2277 = vunpack.c.l.b16 %v1758
        %v2278 = vunpack.c.l.b16 %v1759
        %v2279 = vunpack.c.l.b16 %v1760
        %v2280 = vunpack.c.l.b16 %v1761
        %v2281 = vunpack.c.l.b16 %v1762
        %v2282 = vunpack.c.l.b16 %v1763
        %v2283 = vunpack.c.l.b16 %v1764
        %v2284 = vunpack.c.l.b16 %v1765
        %v2285 = vunpack.c.l.b16 %v1766
        %v2286 = vunpack.c.l.b16 %v1767
        %v2287 = vunpack.c.l.b16 %v1768
        %v2288 = vunpack.c.l.b16 %v1769
        %v2289 = vunpack.c.l.b16 %v1770
        %v2290 = vunpack.c.l.b16 %v1771
        %v2291 = vunpack.c.l.b16 %v1772
        %v2292 = vunpack.c.l.b16 %v1773
        %v2293 = vunpack.c.l.b16 %v1774
        %v2294 = vunpack.c.l.b16 %v1775
        %v2295 = vunpack.c.l.b16 %v1776
        %v2296 = vunpack.c.l.b16 %v1777
        %v2297 = vunpack.c.l.b16 %v1778
        %v2298 = vunpack.c.l.b16 %v1779
        %v2299 = vunpack.c.l.b16 %v1780
        %v2300 = vunpack.c.l.b16 %v1781
        %v2301 = vunpack.c.l.b16 %v1782
        %v2302 = vunpack.c.l.b16 %v1783
        %v2303 = vunpack.c.l.b16 %v1784
        %v2304 = vunpack.c.l.b16 %v1785
        %v2305 = vunpack.c.l.b16 %v1786
        %v2306 = vunpack.c.l.b16 %v1787
        %v2307 = vunpack.c.l.b16 %v1788
        %v2308 = vunpack.c.l.b16 %v1789
        %v2309 = vunpack.c.l.b16 %v1790
        %v2310 = vpack.c.b16 %v2055, %v2054
        %v2311 = vpack.c.b16 %v2057, %v2056
        %v2312 = vpack.c.b16 %v2059, %v2058
        %v2313 = vpack.c.b16 %v2061, %v2060
        %v2314 = vpack.c.b16 %v2063, %v2062
        %v2315 = vpack.c.b16 %v2065, %v2064
        %v2316 = vpack.c.b16 %v2067, %v2066
        %v2317 = vpack.c.b16 %v2069, %v2068
        %v2318 = vpack.c.b16 %v2071, %v2070
        %v2319 = vpack.c.b16 %v2073, %v2072
        %v2320 = vpack.c.b16 %v2075, %v2074
        %v2321 = vpack.c.b16 %v2077, %v2076
        %v2322 = vpack.c.b16 %v2079, %v2078
        %v2323 = vpack.c.b16 %v2081, %v2080
        %v2324 = vpack.c.b16 %v2083, %v2082
        %v2325 = vpack.c.b16 %v2085, %v2084
        %v2326 = vpack.c.b16 %v2087, %v2086
        %v2327 = vpack.c.b16 %v2089, %v2088
        %v2328 = vpack.c.b16 %v2091, %v2090
        %v2329 = vpack.c.b16 %v2093, %v2092
        %v2330 = vpack.c.b16 %v2095, %v2094
        %v2331 = vpack.c.b16 %v2097, %v2096
        %v2332 = vpack.c.b16 %v2099, %v2098
        %v2333 = vpack.c.b16 %v2101, %v2100
        %v2334 = vpack.c.b16 %v2103, %v2102
        %v2335 = vpack.c.b16 %v2105, %v2104
        %v2336 = vpack.c.b16 %v2107, %v2106
        %v2337 = vpack.c.b16 %v2109, %v2108
        %v2338 = vpack.c.b16 %v2111, %v2110
        %v2339 = vpack.c.b16 %v2113, %v2112
        %v2340 = vpack.c.b16 %v2115, %v2114
        %v2341 = vpack.c.b16 %v2117, %v2116
        %v2342 = vpack.c.b16 %v2119, %v2118
        %v2343 = vpack.c.b16 %v2121, %v2120
        %v2344 = vpack.c.b16 %v2123, %v2122
        %v2345 = vpack.c.b16 %v2125, %v2124
        %v2346 = vpack.c.b16 %v2127, %v2126
        %v2347 = vpack.c.b16 %v2129, %v2128
        %v2348 = vpack.c.b16 %v2131, %v2130
        %v2349 = vpack.c.b16 %v2133, %v2132
        %v2350 = vpack.c.b16 %v2135, %v2134
        %v2351 = vpack.c.b16 %v2137, %v2136
        %v2352 = vpack.c.b16 %v2139, %v2138
        %v2353 = vpack.c.b16 %v2141, %v2140
        %v2354 = vpack.c.b16 %v2143, %v2142
        %v2355 = vpack.c.b16 %v2145, %v2144
        %v2356 = vpack.c.b16 %v2147, %v2146
        %v2357 = vpack.c.b16 %v2149, %v2148
        %v2358 = vpack.c.b16 %v2151, %v2150
        %v2359 = vpack.c.b16 %v2153, %v2152
        %v2360 = vpack.c.b16 %v2155, %v2154
        %v2361 = vpack.c.b16 %v2157, %v2156
        %v2362 = vpack.c.b16 %v2159, %v2158
        %v2363 = vpack.c.b16 %v2161, %v2160
        %v2364 = vpack.c.b16 %v2163, %v2162
        %v2365 = vpack.c.b16 %v2165, %v2164
        %v2366 = vpack.c.b16 %v2167, %v2166
        %v2367 = vpack.c.b16 %v2169, %v2168
        %v2368 = vpack.c.b16 %v2171, %v2170
        %v2369 = vpack.c.b16 %v2173, %v2172
        %v2370 = vpack.c.b16 %v2175, %v2174
        %v2371 = vpack.c.b16 %v2177, %v2176
        %v2372 = vpack.c.b16 %v2179, %v2178
        %v2373 = vpack.c.b16 %v2181, %v2180
        %v2374 = vpack.c.b16 %v2183, %v2182
        %v2375 = vpack.c.b16 %v2185, %v2184
        %v2376 = vpack.c.b16 %v2187, %v2186
        %v2377 = vpack.c.b16 %v2189, %v2188
        %v2378 = vpack.c.b16 %v2191, %v2190
        %v2379 = vpack.c.b16 %v2193, %v2192
        %v2380 = vpack.c.b16 %v2195, %v2194
        %v2381 = vpack.c.b16 %v2197, %v2196
        %v2382 = vpack.c.b16 %v2199, %v2198
        %v2383 = vpack.c.b16 %v2201, %v2200
        %v2384 = vpack.c.b16 %v2203, %v2202
        %v2385 = vpack.c.b16 %v2205, %v2204
        %v2386 = vpack.c.b16 %v2207, %v2206
        %v2387 = vpack.c.b16 %v2209, %v2208
        %v2388 = vpack.c.b16 %v2211, %v2210
        %v2389 = vpack.c.b16 %v2213, %v2212
        %v2390 = vpack.c.b16 %v2215, %v2214
        %v2391 = vpack.c.b16 %v2217, %v2216
        %v2392 = vpack.c.b16 %v2219, %v2218
        %v2393 = vpack.c.b16 %v2221, %v2220
        %v2394 = vpack.c.b16 %v2223, %v2222
        %v2395 = vpack.c.b16 %v2225, %v2224
        %v2396 = vpack.c.b16 %v2227, %v2226
        %v2397 = vpack.c.b16 %v2229, %v2228
        %v2398 = vpack.c.b16 %v2231, %v2230
        %v2399 = vpack.c.b16 %v2233, %v2232
        %v2400 = vpack.c.b16 %v2235, %v2234
        %v2401 = vpack.c.b16 %v2237, %v2236
        %v2402 = vpack.c.b16 %v2239, %v2238
        %v2403 = vpack.c.b16 %v2241, %v2240
        %v2404 = vpack.c.b16 %v2243, %v2242
        %v2405 = vpack.c.b16 %v2245, %v2244
        %v2406 = vpack.c.b16 %v2247, %v2246
        %v2407 = vpack.c.b16 %v2249, %v2248
        %v2408 = vpack.c.b16 %v2251, %v2250
        %v2409 = vpack.c.b16 %v2253, %v2252
        %v2410 = vpack.c.b16 %v2255, %v2254
        %v2411 = vpack.c.b16 %v2257, %v2256
        %v2412 = vpack.c.b16 %v2259, %v2258
        %v2413 = vpack.c.b16 %v2261, %v2260
        %v2414 = vpack.c.b16 %v2263, %v2262
        %v2415 = vpack.c.b16 %v2265, %v2264
        %v2416 = vpack.c.b16 %v2267, %v2266
        %v2417 = vpack.c.b16 %v2269, %v2268
        %v2418 = vpack.c.b16 %v2271, %v2270
        %v2419 = vpack.c.b16 %v2273, %v2272
        %v2420 = vpack.c.b16 %v2275, %v2274
        %v2421 = vpack.c.b16 %v2277, %v2276
        %v2422 = vpack.c.b16 %v2279, %v2278
        %v2423 = vpack.c.b16 %v2281, %v2280
        %v2424 = vpack.c.b16 %v2283, %v2282
        %v2425 = vpack.c.b16 %v2285, %v2284
        %v2426 = vpack.c.b16 %v2287, %v2286
        %v2427 = vpack.c.b16 %v2289, %v2288
        %v2428 = vpack.c.b16 %v2291, %v2290
        %v2429 = vpack.c.b16 %v2293, %v2292
        %v2430 = vpack.c.b16 %v2295, %v2294
        %v2431 = vpack.c.b16 %v2297, %v2296
        %v2432 = vpack.c.b16 %v2299, %v2298
        %v2433 = vpack.c.b16 %v2301, %v2300
        %v2434 = vpack.c.b16 %v2303, %v2302
        %v2435 = vpack.c.b16 %v2305, %v2304
        %v2436 = vpack.c.b16 %v2307, %v2306
        %v2437 = vpack.c.b16 %v2309, %v2308
        %2566 = vmatprep.subr.bf16.mxu0 0
        %2567 = vmatpush1.bf16.msra.mxu0 %v2310
        %2568 = vmatprep.subr.bf16.mxu0 0
        %2569 = vmatpush1.bf16.msra.mxu0 %v2311
        %2570 = vmatprep.subr.bf16.mxu0 0
        %2571 = vmatpush1.bf16.msra.mxu0 %v2312
        %2572 = vmatprep.subr.bf16.mxu0 0
        %2573 = vmatpush1.bf16.msra.mxu0 %v2313
        %2574 = vmatprep.subr.bf16.mxu0 0
        %2575 = vmatpush1.bf16.msra.mxu0 %v2314
        %2576 = vmatprep.subr.bf16.mxu0 0
        %2577 = vmatpush1.bf16.msra.mxu0 %v2315
        %2578 = vmatprep.subr.bf16.mxu0 0
        %2579 = vmatpush1.bf16.msra.mxu0 %v2316
        %2580 = vmatprep.subr.bf16.mxu0 0
        %2581 = vmatpush1.bf16.msra.mxu0 %v2317
        %2582 = vmatprep.subr.bf16.mxu0 0
        %2583 = vmatpush1.bf16.msra.mxu0 %v2318
        %2584 = vmatprep.subr.bf16.mxu0 0
        %2585 = vmatpush1.bf16.msra.mxu0 %v2319
        %2586 = vmatprep.subr.bf16.mxu0 0
        %2587 = vmatpush1.bf16.msra.mxu0 %v2320
        %2588 = vmatprep.subr.bf16.mxu0 0
        %2589 = vmatpush1.bf16.msra.mxu0 %v2321
        %2590 = vmatprep.subr.bf16.mxu0 0
        %2591 = vmatpush1.bf16.msra.mxu0 %v2322
        %2592 = vmatprep.subr.bf16.mxu0 0
        %2593 = vmatpush1.bf16.msra.mxu0 %v2323
        %2594 = vmatprep.subr.bf16.mxu0 0
        %2595 = vmatpush1.bf16.msra.mxu0 %v2324
        %2596 = vmatprep.subr.bf16.mxu0 0
        %2597 = vmatpush1.bf16.msra.mxu0 %v2325
        %2598 = vmatprep.mubr.bf16.mxu0 %v1520
        %2599 = vmatmul.mubr.bf16.gmra.mrb[0].mxu0 %v1519
        %v2600 = vpop.f32.mrb[0].mxu0
        %v2601 = vadd.f32 %v1796, %v2600
        %v2602 = vpop.f32.mrb[0].mxu0
        %v2603 = vpop.f32.mrb[0].mxu0
        %v2604 = vadd.f32 %v1796, %v2603
        %v2605 = vpop.f32.mrb[0].mxu0
        %2606 = vdwg.mxu0
        %2607 = vmatprep.subr.bf16.mxu0 0
        %2608 = vmatpush1.bf16.msra.mxu0 %v2326
        %2609 = vmatprep.subr.bf16.mxu0 0
        %2610 = vmatpush1.bf16.msra.mxu0 %v2327
        %2611 = vmatprep.subr.bf16.mxu0 0
        %2612 = vmatpush1.bf16.msra.mxu0 %v2328
        %2613 = vmatprep.subr.bf16.mxu0 0
        %2614 = vmatpush1.bf16.msra.mxu0 %v2329
        %2615 = vmatprep.subr.bf16.mxu0 0
        %2616 = vmatpush1.bf16.msra.mxu0 %v2330
        %2617 = vmatprep.subr.bf16.mxu0 0
        %2618 = vmatpush1.bf16.msra.mxu0 %v2331
        %2619 = vmatprep.subr.bf16.mxu0 0
        %2620 = vmatpush1.bf16.msra.mxu0 %v2332
        %2621 = vmatprep.subr.bf16.mxu0 0
        %2622 = vmatpush1.bf16.msra.mxu0 %v2333
        %2623 = vmatprep.subr.bf16.mxu0 0
        %2624 = vmatpush1.bf16.msra.mxu0 %v2334
        %2625 = vmatprep.subr.bf16.mxu0 0
        %2626 = vmatpush1.bf16.msra.mxu0 %v2335
        %2627 = vmatprep.subr.bf16.mxu0 0
        %2628 = vmatpush1.bf16.msra.mxu0 %v2336
        %2629 = vmatprep.subr.bf16.mxu0 0
        %2630 = vmatpush1.bf16.msra.mxu0 %v2337
        %2631 = vmatprep.subr.bf16.mxu0 0
        %2632 = vmatpush1.bf16.msra.mxu0 %v2338
        %2633 = vmatprep.subr.bf16.mxu0 0
        %2634 = vmatpush1.bf16.msra.mxu0 %v2339
        %2635 = vmatprep.subr.bf16.mxu0 0
        %2636 = vmatpush1.bf16.msra.mxu0 %v2340
        %2637 = vmatprep.subr.bf16.mxu0 0
        %2638 = vmatpush1.bf16.msra.mxu0 %v2341
        %2639 = vmatprep.mubr.bf16.mxu0 %v1522
        %2640 = vmatmul.mubr.bf16.gmra.mrb[0].mxu0 %v1521
        %v2641 = vpop.f32.mrb[0].mxu0
        %v2642 = vadd.f32 %v2601, %v2641
        %v2643 = vpop.f32.mrb[0].mxu0
        %v2644 = vpop.f32.mrb[0].mxu0
        %v2645 = vadd.f32 %v2604, %v2644
        %v2646 = vpop.f32.mrb[0].mxu0
        %2647 = vdwg.mxu0
        %2648 = vmatprep.subr.bf16.mxu0 0
        %2649 = vmatpush1.bf16.msra.mxu0 %v2342
        %2650 = vmatprep.subr.bf16.mxu0 0
        %2651 = vmatpush1.bf16.msra.mxu0 %v2343
        %2652 = vmatprep.subr.bf16.mxu0 0
        %2653 = vmatpush1.bf16.msra.mxu0 %v2344
        %2654 = vmatprep.subr.bf16.mxu0 0
        %2655 = vmatpush1.bf16.msra.mxu0 %v2345
        %2656 = vmatprep.subr.bf16.mxu0 0
        %2657 = vmatpush1.bf16.msra.mxu0 %v2346
        %2658 = vmatprep.subr.bf16.mxu0 0
        %2659 = vmatpush1.bf16.msra.mxu0 %v2347
        %2660 = vmatprep.subr.bf16.mxu0 0
        %2661 = vmatpush1.bf16.msra.mxu0 %v2348
        %2662 = vmatprep.subr.bf16.mxu0 0
        %2663 = vmatpush1.bf16.msra.mxu0 %v2349
        %2664 = vmatprep.subr.bf16.mxu0 0
        %2665 = vmatpush1.bf16.msra.mxu0 %v2350
        %2666 = vmatprep.subr.bf16.mxu0 0
        %2667 = vmatpush1.bf16.msra.mxu0 %v2351
        %2668 = vmatprep.subr.bf16.mxu0 0
        %2669 = vmatpush1.bf16.msra.mxu0 %v2352
        %2670 = vmatprep.subr.bf16.mxu0 0
        %2671 = vmatpush1.bf16.msra.mxu0 %v2353
        %2672 = vmatprep.subr.bf16.mxu0 0
        %2673 = vmatpush1.bf16.msra.mxu0 %v2354
        %2674 = vmatprep.subr.bf16.mxu0 0
        %2675 = vmatpush1.bf16.msra.mxu0 %v2355
        %2676 = vmatprep.subr.bf16.mxu0 0
        %2677 = vmatpush1.bf16.msra.mxu0 %v2356
        %2678 = vmatprep.subr.bf16.mxu0 0
        %2679 = vmatpush1.bf16.msra.mxu0 %v2357
        %2680 = vmatprep.mubr.bf16.mxu0 %v1524
        %2681 = vmatmul.mubr.bf16.gmra.mrb[0].mxu0 %v1523
        %v2682 = vpop.f32.mrb[0].mxu0
        %v2683 = vadd.f32 %v2642, %v2682
        %v2684 = vpop.f32.mrb[0].mxu0
        %v2685 = vpop.f32.mrb[0].mxu0
        %v2686 = vadd.f32 %v2645, %v2685
        %v2687 = vpop.f32.mrb[0].mxu0
        %2688 = vdwg.mxu0
        %2689 = vmatprep.subr.bf16.mxu0 0
        %2690 = vmatpush1.bf16.msra.mxu0 %v2358
        %2691 = vmatprep.subr.bf16.mxu0 0
        %2692 = vmatpush1.bf16.msra.mxu0 %v2359
        %2693 = vmatprep.subr.bf16.mxu0 0
        %2694 = vmatpush1.bf16.msra.mxu0 %v2360
        %2695 = vmatprep.subr.bf16.mxu0 0
        %2696 = vmatpush1.bf16.msra.mxu0 %v2361
        %2697 = vmatprep.subr.bf16.mxu0 0
        %2698 = vmatpush1.bf16.msra.mxu0 %v2362
        %2699 = vmatprep.subr.bf16.mxu0 0
        %2700 = vmatpush1.bf16.msra.mxu0 %v2363
        %2701 = vmatprep.subr.bf16.mxu0 0
        %2702 = vmatpush1.bf16.msra.mxu0 %v2364
        %2703 = vmatprep.subr.bf16.mxu0 0
        %2704 = vmatpush1.bf16.msra.mxu0 %v2365
        %2705 = vmatprep.subr.bf16.mxu0 0
        %2706 = vmatpush1.bf16.msra.mxu0 %v2366
        %2707 = vmatprep.subr.bf16.mxu0 0
        %2708 = vmatpush1.bf16.msra.mxu0 %v2367
        %2709 = vmatprep.subr.bf16.mxu0 0
        %2710 = vmatpush1.bf16.msra.mxu0 %v2368
        %2711 = vmatprep.subr.bf16.mxu0 0
        %2712 = vmatpush1.bf16.msra.mxu0 %v2369
        %2713 = vmatprep.subr.bf16.mxu0 0
        %2714 = vmatpush1.bf16.msra.mxu0 %v2370
        %2715 = vmatprep.subr.bf16.mxu0 0
        %2716 = vmatpush1.bf16.msra.mxu0 %v2371
        %2717 = vmatprep.subr.bf16.mxu0 0
        %2718 = vmatpush1.bf16.msra.mxu0 %v2372
        %2719 = vmatprep.subr.bf16.mxu0 0
        %2720 = vmatpush1.bf16.msra.mxu0 %v2373
        %2721 = vmatprep.mubr.bf16.mxu0 %v1526
        %2722 = vmatmul.mubr.bf16.gmra.mrb[0].mxu0 %v1525
        %v2723 = vpop.f32.mrb[0].mxu0
        %v2724 = vadd.f32 %v2683, %v2723
        %v2725 = vpop.f32.mrb[0].mxu0
        %v2726 = vpop.f32.mrb[0].mxu0
        %v2727 = vadd.f32 %v2686, %v2726
        %v2728 = vpop.f32.mrb[0].mxu0
        %2729 = vdwg.mxu0
        %2730 = vmatprep.subr.bf16.mxu0 0
        %2731 = vmatpush1.bf16.msra.mxu0 %v2374
        %2732 = vmatprep.subr.bf16.mxu0 0
        %2733 = vmatpush1.bf16.msra.mxu0 %v2375
        %2734 = vmatprep.subr.bf16.mxu0 0
        %2735 = vmatpush1.bf16.msra.mxu0 %v2376
        %2736 = vmatprep.subr.bf16.mxu0 0
        %2737 = vmatpush1.bf16.msra.mxu0 %v2377
        %2738 = vmatprep.subr.bf16.mxu0 0
        %2739 = vmatpush1.bf16.msra.mxu0 %v2378
        %2740 = vmatprep.subr.bf16.mxu0 0
        %2741 = vmatpush1.bf16.msra.mxu0 %v2379
        %2742 = vmatprep.subr.bf16.mxu0 0
        %2743 = vmatpush1.bf16.msra.mxu0 %v2380
        %2744 = vmatprep.subr.bf16.mxu0 0
        %2745 = vmatpush1.bf16.msra.mxu0 %v2381
        %2746 = vmatprep.subr.bf16.mxu0 0
        %2747 = vmatpush1.bf16.msra.mxu0 %v2382
        %2748 = vmatprep.subr.bf16.mxu0 0
        %2749 = vmatpush1.bf16.msra.mxu0 %v2383
        %2750 = vmatprep.subr.bf16.mxu0 0
        %2751 = vmatpush1.bf16.msra.mxu0 %v2384
        %2752 = vmatprep.subr.bf16.mxu0 0
        %2753 = vmatpush1.bf16.msra.mxu0 %v2385
        %2754 = vmatprep.subr.bf16.mxu0 0
        %2755 = vmatpush1.bf16.msra.mxu0 %v2386
        %2756 = vmatprep.subr.bf16.mxu0 0
        %2757 = vmatpush1.bf16.msra.mxu0 %v2387
        %2758 = vmatprep.subr.bf16.mxu0 0
        %2759 = vmatpush1.bf16.msra.mxu0 %v2388
        %2760 = vmatprep.subr.bf16.mxu0 0
        %2761 = vmatpush1.bf16.msra.mxu0 %v2389
        %2762 = vmatprep.mubr.bf16.mxu0 %v1528
        %2763 = vmatmul.mubr.bf16.gmra.mrb[0].mxu0 %v1527
        %v2764 = vpop.f32.mrb[0].mxu0
        %v2765 = vadd.f32 %v2724, %v2764
        %v2766 = vpop.f32.mrb[0].mxu0
        %v2767 = vpop.f32.mrb[0].mxu0
        %v2768 = vadd.f32 %v2727, %v2767
        %v2769 = vpop.f32.mrb[0].mxu0
        %2770 = vdwg.mxu0
        %2771 = vmatprep.subr.bf16.mxu0 0
        %2772 = vmatpush1.bf16.msra.mxu0 %v2390
        %2773 = vmatprep.subr.bf16.mxu0 0
        %2774 = vmatpush1.bf16.msra.mxu0 %v2391
        %2775 = vmatprep.subr.bf16.mxu0 0
        %2776 = vmatpush1.bf16.msra.mxu0 %v2392
        %2777 = vmatprep.subr.bf16.mxu0 0
        %2778 = vmatpush1.bf16.msra.mxu0 %v2393
        %2779 = vmatprep.subr.bf16.mxu0 0
        %2780 = vmatpush1.bf16.msra.mxu0 %v2394
        %2781 = vmatprep.subr.bf16.mxu0 0
        %2782 = vmatpush1.bf16.msra.mxu0 %v2395
        %2783 = vmatprep.subr.bf16.mxu0 0
        %2784 = vmatpush1.bf16.msra.mxu0 %v2396
        %2785 = vmatprep.subr.bf16.mxu0 0
        %2786 = vmatpush1.bf16.msra.mxu0 %v2397
        %2787 = vmatprep.subr.bf16.mxu0 0
        %2788 = vmatpush1.bf16.msra.mxu0 %v2398
        %2789 = vmatprep.subr.bf16.mxu0 0
        %2790 = vmatpush1.bf16.msra.mxu0 %v2399
        %2791 = vmatprep.subr.bf16.mxu0 0
        %2792 = vmatpush1.bf16.msra.mxu0 %v2400
        %2793 = vmatprep.subr.bf16.mxu0 0
        %2794 = vmatpush1.bf16.msra.mxu0 %v2401
        %2795 = vmatprep.subr.bf16.mxu0 0
        %2796 = vmatpush1.bf16.msra.mxu0 %v2402
        %2797 = vmatprep.subr.bf16.mxu0 0
        %2798 = vmatpush1.bf16.msra.mxu0 %v2403
        %2799 = vmatprep.subr.bf16.mxu0 0
        %2800 = vmatpush1.bf16.msra.mxu0 %v2404
        %2801 = vmatprep.subr.bf16.mxu0 0
        %2802 = vmatpush1.bf16.msra.mxu0 %v2405
        %2803 = vmatprep.mubr.bf16.mxu0 %v1530
        %2804 = vmatmul.mubr.bf16.gmra.mrb[0].mxu0 %v1529
        %v2805 = vpop.f32.mrb[0].mxu0
        %v2806 = vadd.f32 %v2765, %v2805
        %v2807 = vpop.f32.mrb[0].mxu0
        %v2808 = vpop.f32.mrb[0].mxu0
        %v2809 = vadd.f32 %v2768, %v2808
        %v2810 = vpop.f32.mrb[0].mxu0
        %2811 = vdwg.mxu0
        %2812 = vmatprep.subr.bf16.mxu0 0
        %2813 = vmatpush1.bf16.msra.mxu0 %v2406
        %2814 = vmatprep.subr.bf16.mxu0 0
        %2815 = vmatpush1.bf16.msra.mxu0 %v2407
        %2816 = vmatprep.subr.bf16.mxu0 0
        %2817 = vmatpush1.bf16.msra.mxu0 %v2408
        %2818 = vmatprep.subr.bf16.mxu0 0
        %2819 = vmatpush1.bf16.msra.mxu0 %v2409
        %2820 = vmatprep.subr.bf16.mxu0 0
        %2821 = vmatpush1.bf16.msra.mxu0 %v2410
        %2822 = vmatprep.subr.bf16.mxu0 0
        %2823 = vmatpush1.bf16.msra.mxu0 %v2411
        %2824 = vmatprep.subr.bf16.mxu0 0
        %2825 = vmatpush1.bf16.msra.mxu0 %v2412
        %2826 = vmatprep.subr.bf16.mxu0 0
        %2827 = vmatpush1.bf16.msra.mxu0 %v2413
        %2828 = vmatprep.subr.bf16.mxu0 0
        %2829 = vmatpush1.bf16.msra.mxu0 %v2414
        %2830 = vmatprep.subr.bf16.mxu0 0
        %2831 = vmatpush1.bf16.msra.mxu0 %v2415
        %2832 = vmatprep.subr.bf16.mxu0 0
        %2833 = vmatpush1.bf16.msra.mxu0 %v2416
        %2834 = vmatprep.subr.bf16.mxu0 0
        %2835 = vmatpush1.bf16.msra.mxu0 %v2417
        %2836 = vmatprep.subr.bf16.mxu0 0
        %2837 = vmatpush1.bf16.msra.mxu0 %v2418
        %2838 = vmatprep.subr.bf16.mxu0 0
        %2839 = vmatpush1.bf16.msra.mxu0 %v2419
        %2840 = vmatprep.subr.bf16.mxu0 0
        %2841 = vmatpush1.bf16.msra.mxu0 %v2420
        %2842 = vmatprep.subr.bf16.mxu0 0
        %2843 = vmatpush1.bf16.msra.mxu0 %v2421
        %2844 = vmatprep.mubr.bf16.mxu0 %v1532
        %2845 = vmatmul.mubr.bf16.gmra.mrb[0].mxu0 %v1531
        %v2846 = vpop.f32.mrb[0].mxu0
        %v2847 = vadd.f32 %v2806, %v2846
        %v2848 = vpop.f32.mrb[0].mxu0
        %v2849 = vpop.f32.mrb[0].mxu0
        %v2850 = vadd.f32 %v2809, %v2849
        %v2851 = vpop.f32.mrb[0].mxu0
        %2852 = vdwg.mxu0
        %2853 = vmatprep.subr.bf16.mxu0 0
        %2854 = vmatpush1.bf16.msra.mxu0 %v2422
        %2855 = vmatprep.subr.bf16.mxu0 0
        %2856 = vmatpush1.bf16.msra.mxu0 %v2423
        %2857 = vmatprep.subr.bf16.mxu0 0
        %2858 = vmatpush1.bf16.msra.mxu0 %v2424
        %2859 = vmatprep.subr.bf16.mxu0 0
        %2860 = vmatpush1.bf16.msra.mxu0 %v2425
        %2861 = vmatprep.subr.bf16.mxu0 0
        %2862 = vmatpush1.bf16.msra.mxu0 %v2426
        %2863 = vmatprep.subr.bf16.mxu0 0
        %2864 = vmatpush1.bf16.msra.mxu0 %v2427
        %2865 = vmatprep.subr.bf16.mxu0 0
        %2866 = vmatpush1.bf16.msra.mxu0 %v2428
        %2867 = vmatprep.subr.bf16.mxu0 0
        %2868 = vmatpush1.bf16.msra.mxu0 %v2429
        %2869 = vmatprep.subr.bf16.mxu0 0
        %2870 = vmatpush1.bf16.msra.mxu0 %v2430
        %2871 = vmatprep.subr.bf16.mxu0 0
        %2872 = vmatpush1.bf16.msra.mxu0 %v2431
        %2873 = vmatprep.subr.bf16.mxu0 0
        %2874 = vmatpush1.bf16.msra.mxu0 %v2432
        %2875 = vmatprep.subr.bf16.mxu0 0
        %2876 = vmatpush1.bf16.msra.mxu0 %v2433
        %2877 = vmatprep.subr.bf16.mxu0 0
        %2878 = vmatpush1.bf16.msra.mxu0 %v2434
        %2879 = vmatprep.subr.bf16.mxu0 0
        %2880 = vmatpush1.bf16.msra.mxu0 %v2435
        %2881 = vmatprep.subr.bf16.mxu0 0
        %2882 = vmatpush1.bf16.msra.mxu0 %v2436
        %2883 = vmatprep.subr.bf16.mxu0 0
        %2884 = vmatpush1.bf16.msra.mxu0 %v2437
        %2885 = vmatprep.mubr.bf16.mxu0 %v1534
        %2886 = vmatmul.mubr.bf16.gmra.mrb[0].mxu0 %v1533
        %v2887 = vpop.f32.mrb[0].mxu0
        %v2888 = vadd.f32 %v2847, %v2887
        %v2889 = vpop.f32.mrb[0].mxu0
        %v2890 = vpop.f32.mrb[0].mxu0
        %v2891 = vadd.f32 %v2850, %v2890
        %v2892 = vpop.f32.mrb[0].mxu0
        %2893 = vdwg.mxu0
        %2894 = vst [vmem:[%s284] sm:$0xff] %v2888
        %2895 = vst [vmem:[%s284 + $0x8] sm:$0xff] %v2891
        %s2896 = sand.u32 %s142, 1
        %s2897 = scalar_lea.sflag [#allocation4], %s2896
        %s2898 = sand.u32 %s142, 1
        %s2899 = smul.addr %s2898, 16
        %s2900 = scalar_lea.vmem [#allocation10], %s2899
        // Predicated region
        $region57: #{tpu_custom_call.1} parent=39 // pred_check
          %p2901 = pneg %p152
        $region58: #{tpu_custom_call.1} parent=39 // pred_check_branch
          %2903 = sbr.rel (%p2901) target = $region60
        $region59: #{tpu_custom_call.1} parent=39 // pred_region
          %s2904 = smul.u32 2, %s24
          %s2906 = ssub.s32 256, 256
          %2907 = vsyncadd %s2897, %s2906
          %s2908 = smul.addr %s2904, 128
          %s2909 = scalar_lea.hbm %s5, %s2908
          %s2910 = sshll.u32 %s2900, 4
          %s2911 = int_to_ptr.vmem [resolvable:$true] %s2910
          %2916 = dma.vmem_to_hbm [thread:$0]  %s2911, 256, %s2909, %s2897, 128, 128, 8
        $region60: #{tpu_custom_call.1} parent=39 // pred_fallthru
          _
      $region40: #{tpu_custom_call.1} parent=5 // pred_fallthru
        _
      %p2917 = scmp.le.s32.totalorder 2, %s19
      // Predicated region
      $region61: #{tpu_custom_call.1} parent=5 // pred_check
        %p2918 = pneg %p2917
      $region62: #{tpu_custom_call.1} parent=5 // pred_check_branch
        %2920 = sbr.rel (%p2918) target = $region64
      $region63: #{tpu_custom_call.1} parent=5 // pred_region
        %s2921 = ssub.s32 %s19, 2
        // Predicated region
        $region65: #{tpu_custom_call.1} parent=63 // pred_check
          %p2922 = pneg %p158
        $region66: #{tpu_custom_call.1} parent=63 // pred_check_branch
          %2924 = sbr.rel (%p2922) target = $region68
        $region67: #{tpu_custom_call.1} parent=63 // pred_region
          %s2925 = sand.u32 %s143, 1
          %s2926 = scalar_lea.sflag [#allocation4], %s2925
          %s2927 = sand.u32 %s143, 1
          %s2928 = smul.addr %s2927, 16
          %s2929 = scalar_lea.vmem [#allocation10], %s2928
          %2930 = dma.done %s2926, 256
        $region68: #{tpu_custom_call.1} parent=63 // pred_fallthru
          _
      $region64: #{tpu_custom_call.1} parent=5 // pred_fallthru
        _
    $region6: #{tpu_custom_call.1} parent=1 // loop_footer
      %s23 = sadd.s32 1, %s19
    $region7: #{tpu_custom_call.1} parent=1 // loop_footer_branch
      %18 = sbr.rel target = $region3
    $region8: #{tpu_custom_call.1} parent=1 // loop_exit
      _
    %2931 = vsyncpa [#allocation3], 1
    %s2932 = scalar_lea.sflag [#allocation3], 1
    %2933 = vsyncpa %s2932, 1
    %2934 = vsyncpa [#allocation6], 1
    %2935 = vsyncpa [#allocation9], 1
    %2936 = vsyncpa [#allocation4], 1
    %s2937 = scalar_lea.sflag [#allocation4], 1
    %2938 = vsyncpa %s2937, 1

</llo_original>
